<compile_context>
chip_gen: v6e
topology: v6e:2x2x1
jax: 0.10.0
libtpu: 0.0.40
codegen_flags: <defaults>
</compile_context>

<pallas_src>
import functools

import jax
import jax.numpy as jnp
from jax.experimental import pallas as pl
from jax.experimental.pallas import tpu as pltpu

_H1, _H2 = 512, 128


def _round_up(n, m):
    return ((n + m - 1) // m) * m


def _cdiv(a, b):
    return -(-a // b)


def _vmem_capacity_bytes():
    """Physical VMEM per TensorCore; conservative fallback if unavailable."""
    try:
        info = pltpu.get_tpu_info()
        for attr in ("vmem_capacity_bytes", "vmem_size_bytes", "vmem_bytes"):
            v = getattr(info, attr, None)
            if v:
                return int(v)
    except Exception:
        pass
    return 64 << 20  # v7x (smallest current generation)


def _mlp_kernel(x_ref, w1_ref, b1_ref, w2_ref, b2_ref, w3_ref, b3_ref,
                o_ref, acc_ref, *, approx_sigmoid):
    k = pl.program_id(1)

    # Layer 1 (MXU), K-tiled: partial (TB, tk) @ (tk, 512) into f32 scratch.
    # x is cast to the weight dtype in VMEM (no wrapper-side cast pass).
    contrib = jnp.dot(x_ref[...].astype(w1_ref.dtype), w1_ref[...],
                      preferred_element_type=jnp.float32)

    @pl.when(k == 0)
    def _():
        acc_ref[...] = contrib

    @pl.when(k > 0)
    def _():
        acc_ref[...] += contrib

    @pl.when(k == pl.num_programs(1) - 1)
    def _():
        # Bias + ReLU in f32.  Dropout(0.2): identity at inference.
        h1 = jnp.maximum(acc_ref[...] + b1_ref[...], 0.0)

        # Layer 2 (MXU): (TB, 512) @ (512, 128).  Dropout(0.1): identity.
        h2 = jnp.dot(h1.astype(w2_ref.dtype), w2_ref[...],
                     preferred_element_type=jnp.float32)
        h2 = jnp.maximum(h2 + b2_ref[...], 0.0)

        # Layer 3: VPU multiply + XLU lane reduction instead of an N=1 MXU
        # matmul.
        z = jnp.sum(h2 * w3_ref[...], axis=-1, keepdims=True) + b3_ref[...]

        # Sigmoid: exp on the EUP.  Fast path uses the EUP approx reciprocal
        # (off the VALU); validation path stays exact.
        e = jnp.exp(-z)
        if approx_sigmoid:
            sig = pl.reciprocal(1.0 + e, approx=True)
        else:
            sig = 1.0 / (1.0 + e)
        o_ref[...] = sig.astype(o_ref.dtype)


def reply_intent_classifier_forward(x, params, *, batch_tile=1024, k_tile=None,
                                    use_bf16=True):
    """Forward pass of ReplyIntentClassifierModel (inference semantics)."""
    w1, b1, w2, b2, w3, b3 = params
    batch, d = x.shape

    # Small operands in f32, shaped for lane-friendly broadcasting.
    b1_in = jnp.reshape(b1, (1, _H1)).astype(jnp.float32)
    b2_in = jnp.reshape(b2, (1, _H2)).astype(jnp.float32)
    w3_row = jnp.reshape(w3, (1, _H2)).astype(jnp.float32)
    b3_s = jnp.reshape(b3, (1, 1)).astype(jnp.float32)

    w_dtype = jnp.bfloat16 if use_bf16 else jnp.float32
    w_isz = jnp.dtype(w_dtype).itemsize
    w1_in = w1.astype(w_dtype)
    w2_in = w2.astype(w_dtype)
    # x streams as-is (cast happens in-kernel) -> ~half the activation HBM
    # traffic vs. a separate wrapper-side bf16 cast for f32 inputs.
    x_in = x
    x_isz = jnp.dtype(x_in.dtype).itemsize

    # --- K (input_dim) tiling: resident w1 when small, streamed when huge. --
    if k_tile is not None:
        tk = min(_round_up(min(int(k_tile), d), 128), _round_up(d, 128))
    elif d * _H1 * w_isz <= (16 << 20):     # single-copy w1 comfortably fits
        tk = d
    else:                                   # large input_dim: stream over K (v7x: 64 MiB VMEM)
        tk = 2048
    if tk >= d:
        tk, nk, d_pad = d, 1, d
    else:
        d_pad = _round_up(d, tk)
        nk = d_pad // tk
    if d_pad != d:
        # Zero-padding the contraction axis is exact for the matmul.
        x_in = jnp.pad(x_in, ((0, 0), (0, d_pad - d)))
        w1_in = jnp.pad(w1_in, ((0, d_pad - d), (0, 0)))

    # --- Batch tiling: as large as the VMEM budget allows. ------------------
    padded_batch = _round_up(batch, 8)

    # Worst-case (double-buffered) resident bytes; actual call requests
    # Buffered(1) for constant-index operands, so this is conservative.
    resident = (2 * tk * _H1 * w_isz                       # w1 block(s)
                + 2 * _H1 * _H2 * w_isz                    # w2
                + 2 * (_H1 + _H2 + _H2 + 1) * 4)           # b1, b2, w3 row, b3
    per_row = (2 * tk * x_isz                              # streamed x tile (x2 buffers)
               + _H1 * 4                                   # layer-1 f32 acc scratch
               + (_H1 + _H2) * 4                           # h1 / h2 temporaries
               + 2 * 1 * 4)                                # output tile (x2 buffers)

    capacity = _vmem_capacity_bytes()
    budget = min(capacity * 3 // 4, 100 << 20)
    tb_max = max(8, ((budget - resident) // per_row) // 8 * 8)
    tb = max(8, min(_round_up(batch_tile, 8), padded_batch, tb_max))

    # v7x megacore: ensure >= 2 "parallel" batch steps whenever the batch is
    # big enough to split, so both TensorCores get work (harmless on v5e/v6e).
    if padded_batch >= 16:
        nbt = max(2, _cdiv(padded_batch, tb))
        tb = min(tb, max(8, _round_up(_cdiv(padded_batch, nbt), 8)))
    grid_b = _cdiv(batch, tb)

    # Accurate, generation-capped scoped-VMEM limit (always set).
    est = resident + tb * per_row
    cap = min(capacity - (4 << 20), 100 << 20)
    vmem_limit = int(min(cap, max(32 << 20, est + (4 << 20))))

    flops = 2 * batch * (d * _H1 + _H1 * _H2 + _H2)
    bytes_accessed = (x_in.size * x_isz
                      + w1_in.size * w_isz + w2_in.size * w_isz
                      + (_H1 + _H2 + _H2 + 1) * 4
                      + batch * 4)
    cost = pl.CostEstimate(flops=int(flops), transcendentals=int(2 * batch),
                           bytes_accessed=int(bytes_accessed))

    kernel = functools.partial(_mlp_kernel, approx_sigmoid=use_bf16)

    def call(single_buffer_resident):
        # Constant-index (VMEM-resident) operands: request single buffering.
        res_kwargs = ({"pipeline_mode": pl.Buffered(1)}
                      if single_buffer_resident else {})
        # w1 streams over K when nk > 1 -> keep default double-buffering.
        w1_kwargs = res_kwargs if nk == 1 else {}

        def const_spec(shape):
            return pl.BlockSpec(shape, lambda i, k: (0, 0), **res_kwargs)

        return pl.pallas_call(
            kernel,
            out_shape=jax.ShapeDtypeStruct((batch, 1), jnp.float32),
            grid=(grid_b, nk),
            in_specs=[
                pl.BlockSpec((tb, tk), lambda i, k: (i, k)),          # x: streamed
                pl.BlockSpec((tk, _H1), lambda i, k: (k, 0),
                             **w1_kwargs),                            # w1
                const_spec((1, _H1)),                                 # b1
                const_spec((_H1, _H2)),                               # w2
                const_spec((1, _H2)),                                 # b2
                const_spec((1, _H2)),                                 # w3 as lane row
                const_spec((1, 1)),                                   # b3
            ],
            out_specs=pl.BlockSpec((tb, 1), lambda i, k: (i, 0)),
            scratch_shapes=[pltpu.VMEM((tb, _H1), jnp.float32)],
            compiler_params=pltpu.CompilerParams(
                dimension_semantics=("parallel", "arbitrary"),
                vmem_limit_bytes=vmem_limit),
            cost_estimate=cost,
        )(x_in, w1_in, b1_in, w2_in, b2_in, w3_row, b3_s)

    try:
        out = call(True)
    except Exception:
        # Fallback for jax versions without BlockSpec pipeline_mode /
        # Buffered(1) support; vmem_limit already sized for double buffering.
        out = call(False)

    # PyTorch .squeeze(): drops the size-1 column (and batch dim if B == 1).
    return jnp.squeeze(out)


def init_params(key, input_dim):
    """Deterministic init matching PyTorch nn.Linear default:
    U(-1/sqrt(fan_in), 1/sqrt(fan_in)) for weights and biases."""
    dims = [(input_dim, _H1), (_H1, _H2), (_H2, 1)]
    params = []
    for (fan_in, fan_out) in dims:
        key, kw, kb = jax.random.split(key, 3)
        bound = 1.0 / jnp.sqrt(float(fan_in))
        w = jax.random.uniform(kw, (fan_in, fan_out), jnp.float32, -bound, bound)
        b = jax.random.uniform(kb, (1, fan_out), jnp.float32, -bound, bound)
        params += [w, b]
    return tuple(params)


def _reference_forward(x, params):
    """Plain-JAX f32 reference for correctness checking."""
    w1, b1, w2, b2, w3, b3 = params
    h1 = jnp.maximum(x @ w1 + b1, 0.0)
    h2 = jnp.maximum(h1 @ w2 + b2, 0.0)
    z = h2 @ w3 + b3
    return jnp.squeeze(jax.nn.sigmoid(z))


if __name__ == "__main__":
    key = jax.random.PRNGKey(0)
    k_x, k_p, k_x2, k_x3 = jax.random.split(key, 4)

    # Small shapes consistent with the module.
    batch, input_dim = 8, 32
    x = jax.random.normal(k_x, (batch, input_dim), jnp.float32)
    params = init_params(k_p, input_dim)
    ref = _reference_forward(x, params)

    # f32 path (exact sigmoid): matches the f32 (PyTorch) reference closely.
    out_f32 = jax.block_until_ready(
        reply_intent_classifier_forward(x, params, use_bf16=False))
    assert out_f32.shape == (batch,), out_f32.shape
    assert jnp.allclose(out_f32, ref, atol=2e-3, rtol=2e-3), (out_f32, ref)

    # bf16 MXU path (default): looser tolerance.
    out_bf16 = jax.block_until_ready(
        reply_intent_classifier_forward(x, params, use_bf16=True))
    assert out_bf16.shape == (batch,), out_bf16.shape
    assert jnp.allclose(out_bf16, ref, atol=3e-2, rtol=3e-2), (out_bf16, ref)

    # Larger batch: exercises >=2 parallel batch tiles (megacore split).
    batch2, input_dim2 = 256, 64
    x2 = jax.random.normal(k_x2, (batch2, input_dim2), jnp.float32)
    params2 = init_params(k_p, input_dim2)
    ref2 = _reference_forward(x2, params2)
    out2 = jax.block_until_ready(reply_intent_classifier_forward(x2, params2))
    assert out2.shape == (batch2,), out2.shape
    assert jnp.allclose(out2, ref2, atol=3e-2, rtol=3e-2), (out2, ref2)

    # K-tiled layer-1 path (large-input_dim fallback), forced small here.
    batch3, input_dim3 = 64, 256
    x3 = jax.random.normal(k_x3, (batch3, input_dim3), jnp.float32)
    params3 = init_params(k_p, input_dim3)
    ref3 = _reference_forward(x3, params3)
    out3 = jax.block_until_ready(
        reply_intent_classifier_forward(x3, params3, k_tile=128, use_bf16=False))
    assert out3.shape == (batch3,), out3.shape
    assert jnp.allclose(out3, ref3, atol=2e-3, rtol=2e-3), (out3, ref3)

    print("KERNEL_OK")
</pallas_src>

<mosaic_0001>
module attributes {stable_mosaic.version = 11 : i64} {
  func.func @_mlp_kernel(%arg0: i32, %arg1: i32, %arg2: memref<8x32xf32, #tpu.memory_space<vmem>>, %arg3: memref<32x512xf32, #tpu.memory_space<vmem>>, %arg4: memref<1x512xf32, #tpu.memory_space<vmem>>, %arg5: memref<512x128xf32, #tpu.memory_space<vmem>>, %arg6: memref<1x128xf32, #tpu.memory_space<vmem>>, %arg7: memref<1x128xf32, #tpu.memory_space<vmem>>, %arg8: memref<1x1xf32, #tpu.memory_space<vmem>>, %arg9: memref<8x1xf32, #tpu.memory_space<vmem>>, %arg10: memref<8x512xf32, #tpu.memory_space<vmem>>) attributes {dimension_semantics = [#tpu.dimension_semantics<parallel>, #tpu.dimension_semantics<arbitrary>], iteration_bounds = array<i64: 1, 1>, scalar_prefetch = 0 : i64, scratch_operands = 1 : i64, tpu.core_type = #tpu.core_type<tc>, window_params = [{transform_indices = @transform_0, window_bounds = array<i64: 8, 32>}, {pipeline_mode = #tpu.pipeline_mode<synchronous>, transform_indices = @transform_1, window_bounds = array<i64: 32, 512>}, {pipeline_mode = #tpu.pipeline_mode<synchronous>, transform_indices = @transform_2, window_bounds = array<i64: 1, 512>}, {pipeline_mode = #tpu.pipeline_mode<synchronous>, transform_indices = @transform_3, window_bounds = array<i64: 512, 128>}, {pipeline_mode = #tpu.pipeline_mode<synchronous>, transform_indices = @transform_4, window_bounds = array<i64: 1, 128>}, {pipeline_mode = #tpu.pipeline_mode<synchronous>, transform_indices = @transform_5, window_bounds = array<i64: 1, 128>}, {pipeline_mode = #tpu.pipeline_mode<synchronous>, transform_indices = @transform_6, window_bounds = array<i64: 1, 1>}, {transform_indices = @transform_7, window_bounds = array<i64: 8, 1>}]} {
    %c0 = arith.constant 0 : index
    %c0_0 = arith.constant 0 : index
    %0 = vector.load %arg2[%c0, %c0_0] : memref<8x32xf32, #tpu.memory_space<vmem>>, vector<8x32xf32>
    %c0_1 = arith.constant 0 : index
    %c0_2 = arith.constant 0 : index
    %1 = vector.load %arg3[%c0_1, %c0_2] : memref<32x512xf32, #tpu.memory_space<vmem>>, vector<32x512xf32>
    %cst = arith.constant dense<0.000000e+00> : vector<8x512xf32>
    %2 = tpu.matmul %0, %1, %cst {dimension_numbers = #tpu.dot_dimension_numbers<[1], [0], [0], [1], [0, 0, 1, 1], [], []>} : vector<8x32xf32>, vector<32x512xf32>, vector<8x512xf32> -> vector<8x512xf32>
    %c0_i32 = arith.constant 0 : i32
    %3 = arith.cmpi eq, %arg1, %c0_i32 : i32
    %4 = arith.extui %3 : i1 to i32
    %c0_i32_3 = arith.constant 0 : i32
    %5 = arith.cmpi ne, %4, %c0_i32_3 : i32
    scf.if %5 {
      %c0_8 = arith.constant 0 : index
      %c0_9 = arith.constant 0 : index
      %12 = vector.load %arg10[%c0_8, %c0_9] : memref<8x512xf32, #tpu.memory_space<vmem>>, vector<8x512xf32>
      tpu.vector_store %arg10[%c0_8, %c0_9], %2 {strides = array<i32>} : memref<8x512xf32, #tpu.memory_space<vmem>>, vector<8x512xf32>,
    } else {
    }
    %c0_i32_4 = arith.constant 0 : i32
    %6 = arith.cmpi sgt, %arg1, %c0_i32_4 : i32
    %7 = arith.extui %6 : i1 to i32
    %c0_i32_5 = arith.constant 0 : i32
    %8 = arith.cmpi ne, %7, %c0_i32_5 : i32
    scf.if %8 {
      %c0_8 = arith.constant 0 : index
      %c0_9 = arith.constant 0 : index
      %12 = vector.load %arg10[%c0_8, %c0_9] : memref<8x512xf32, #tpu.memory_space<vmem>>, vector<8x512xf32>
      %13 = arith.addf %12, %2 : vector<8x512xf32>
      %c0_10 = arith.constant 0 : index
      %c0_11 = arith.constant 0 : index
      %14 = vector.load %arg10[%c0_10, %c0_11] : memref<8x512xf32, #tpu.memory_space<vmem>>, vector<8x512xf32>
      tpu.vector_store %arg10[%c0_10, %c0_11], %13 {strides = array<i32>} : memref<8x512xf32, #tpu.memory_space<vmem>>, vector<8x512xf32>,
    } else {
    }
    %c0_i32_6 = arith.constant 0 : i32
    %9 = arith.cmpi eq, %arg1, %c0_i32_6 : i32
    %10 = arith.extui %9 : i1 to i32
    %c0_i32_7 = arith.constant 0 : i32
    %11 = arith.cmpi ne, %10, %c0_i32_7 : i32
    scf.if %11 {
      %c0_8 = arith.constant 0 : index
      %c0_9 = arith.constant 0 : index
      %12 = vector.load %arg10[%c0_8, %c0_9] : memref<8x512xf32, #tpu.memory_space<vmem>>, vector<8x512xf32>
      %c0_10 = arith.constant 0 : index
      %c0_11 = arith.constant 0 : index
      %13 = vector.load %arg4[%c0_10, %c0_11] : memref<1x512xf32, #tpu.memory_space<vmem>>, vector<1x512xf32>
      %14 = vector.broadcast %13 : vector<1x512xf32> to vector<8x512xf32>
      %15 = arith.addf %12, %14 : vector<8x512xf32>
      %cst_12 = arith.constant 0.000000e+00 : f32
      %16 = vector.broadcast %cst_12 : f32 to vector<8x512xf32>
      %17 = arith.maximumf %15, %16 : vector<8x512xf32>
      %c0_13 = arith.constant 0 : index
      %c0_14 = arith.constant 0 : index
      %18 = vector.load %arg5[%c0_13, %c0_14] : memref<512x128xf32, #tpu.memory_space<vmem>>, vector<512x128xf32>
      %cst_15 = arith.constant dense<0.000000e+00> : vector<8x128xf32>
      %19 = tpu.matmul %17, %18, %cst_15 {dimension_numbers = #tpu.dot_dimension_numbers<[1], [0], [0], [1], [0, 0, 1, 1], [], []>} : vector<8x512xf32>, vector<512x128xf32>, vector<8x128xf32> -> vector<8x128xf32>
      %c0_16 = arith.constant 0 : index
      %c0_17 = arith.constant 0 : index
      %20 = vector.load %arg6[%c0_16, %c0_17] : memref<1x128xf32, #tpu.memory_space<vmem>>, vector<1x128xf32>
      %21 = vector.broadcast %20 : vector<1x128xf32> to vector<8x128xf32>
      %22 = arith.addf %19, %21 : vector<8x128xf32>
      %cst_18 = arith.constant 0.000000e+00 : f32
      %23 = vector.broadcast %cst_18 : f32 to vector<8x128xf32>
      %24 = arith.maximumf %22, %23 : vector<8x128xf32>
      %c0_19 = arith.constant 0 : index
      %c0_20 = arith.constant 0 : index
      %25 = vector.load %arg7[%c0_19, %c0_20] : memref<1x128xf32, #tpu.memory_space<vmem>>, vector<1x128xf32>
      %26 = vector.broadcast %25 : vector<1x128xf32> to vector<8x128xf32>
      %27 = arith.mulf %24, %26 : vector<8x128xf32>
      %cst_21 = arith.constant dense<0.000000e+00> : vector<8xf32>
      %28 = vector.multi_reduction <add>, %27, %cst_21 [1] : vector<8x128xf32> to vector<8xf32>
      %29 = vector.shape_cast %28 : vector<8xf32> to vector<8x1xf32>
      %c0_22 = arith.constant 0 : index
      %c0_23 = arith.constant 0 : index
      %30 = vector.load %arg8[%c0_22, %c0_23] : memref<1x1xf32, #tpu.memory_space<vmem>>, vector<1x1xf32>
      %31 = vector.broadcast %30 : vector<1x1xf32> to vector<8x1xf32>
      %32 = arith.addf %29, %31 : vector<8x1xf32>
      %cst_24 = arith.constant 0.000000e+00 : f32
      %33 = vector.broadcast %cst_24 : f32 to vector<8x1xf32>
      %34 = arith.subf %33, %32 : vector<8x1xf32>
      %35 = math.exp %34 : vector<8x1xf32>
      %cst_25 = arith.constant 1.000000e+00 : f32
      %36 = vector.broadcast %cst_25 : f32 to vector<8x1xf32>
      %37 = arith.addf %36, %35 : vector<8x1xf32>
      %cst_26 = arith.constant 1.000000e+00 : f32
      %38 = vector.broadcast %cst_26 : f32 to vector<8x1xf32>
      %39 = arith.divf %38, %37 : vector<8x1xf32>
      %c0_27 = arith.constant 0 : index
      %c0_28 = arith.constant 0 : index
      %40 = vector.load %arg9[%c0_27, %c0_28] : memref<8x1xf32, #tpu.memory_space<vmem>>, vector<8x1xf32>
      tpu.vector_store %arg9[%c0_27, %c0_28], %39 {strides = array<i32>} : memref<8x1xf32, #tpu.memory_space<vmem>>, vector<8x1xf32>,
    } else {
    }
    return
  }
  func.func @transform_0(%arg0: i32, %arg1: i32) -> (i32, i32) {
    %c0_i32 = arith.constant 0 : i32
    return %arg0, %arg1 : i32, i32
  }
  func.func @transform_1(%arg0: i32, %arg1: i32) -> (i32, i32) {
    %c0_i32 = arith.constant 0 : i32
    %c0_i32_0 = arith.constant 0 : i32
    return %arg1, %c0_i32 : i32, i32
  }
  func.func @transform_2(%arg0: i32, %arg1: i32) -> (i32, i32) {
    %c0_i32 = arith.constant 0 : i32
    %c0_i32_0 = arith.constant 0 : i32
    %c0_i32_1 = arith.constant 0 : i32
    return %c0_i32, %c0_i32_0 : i32, i32
  }
  func.func @transform_3(%arg0: i32, %arg1: i32) -> (i32, i32) {
    %c0_i32 = arith.constant 0 : i32
    %c0_i32_0 = arith.constant 0 : i32
    %c0_i32_1 = arith.constant 0 : i32
    return %c0_i32, %c0_i32_0 : i32, i32
  }
  func.func @transform_4(%arg0: i32, %arg1: i32) -> (i32, i32) {
    %c0_i32 = arith.constant 0 : i32
    %c0_i32_0 = arith.constant 0 : i32
    %c0_i32_1 = arith.constant 0 : i32
    return %c0_i32, %c0_i32_0 : i32, i32
  }
  func.func @transform_5(%arg0: i32, %arg1: i32) -> (i32, i32) {
    %c0_i32 = arith.constant 0 : i32
    %c0_i32_0 = arith.constant 0 : i32
    %c0_i32_1 = arith.constant 0 : i32
    return %c0_i32, %c0_i32_0 : i32, i32
  }
  func.func @transform_6(%arg0: i32, %arg1: i32) -> (i32, i32) {
    %c0_i32 = arith.constant 0 : i32
    %c0_i32_0 = arith.constant 0 : i32
    %c0_i32_1 = arith.constant 0 : i32
    return %c0_i32, %c0_i32_0 : i32, i32
  }
  func.func @transform_7(%arg0: i32, %arg1: i32) -> (i32, i32) {
    %c0_i32 = arith.constant 0 : i32
    %c0_i32_0 = arith.constant 0 : i32
    return %arg0, %c0_i32 : i32, i32
  }
}

module attributes {stable_mosaic.version = 11 : i64} {
  func.func @_mlp_kernel(%arg0: i32, %arg1: i32, %arg2: memref<8x32xf32, #tpu.memory_space<vmem>>, %arg3: memref<32x512xf32, #tpu.memory_space<vmem>>, %arg4: memref<1x512xf32, #tpu.memory_space<vmem>>, %arg5: memref<512x128xf32, #tpu.memory_space<vmem>>, %arg6: memref<1x128xf32, #tpu.memory_space<vmem>>, %arg7: memref<1x128xf32, #tpu.memory_space<vmem>>, %arg8: memref<1x1xf32, #tpu.memory_space<vmem>>, %arg9: memref<8x1xf32, #tpu.memory_space<vmem>>, %arg10: memref<8x512xf32, #tpu.memory_space<vmem>>) attributes {dimension_semantics = [#tpu.dimension_semantics<parallel>, #tpu.dimension_semantics<arbitrary>], iteration_bounds = array<i64: 1, 1>, scalar_prefetch = 0 : i64, scratch_operands = 1 : i64, tpu.core_type = #tpu.core_type<tc>, window_params = [{transform_indices = @transform_0, window_bounds = array<i64: 8, 32>}, {transform_indices = @transform_1, window_bounds = array<i64: 32, 512>}, {pipeline_mode = #tpu.pipeline_mode<synchronous>, transform_indices = @transform_2, window_bounds = array<i64: 1, 512>}, {pipeline_mode = #tpu.pipeline_mode<synchronous>, transform_indices = @transform_3, window_bounds = array<i64: 512, 128>}, {pipeline_mode = #tpu.pipeline_mode<synchronous>, transform_indices = @transform_4, window_bounds = array<i64: 1, 128>}, {pipeline_mode = #tpu.pipeline_mode<synchronous>, transform_indices = @transform_5, window_bounds = array<i64: 1, 128>}, {pipeline_mode = #tpu.pipeline_mode<synchronous>, transform_indices = @transform_6, window_bounds = array<i64: 1, 1>}, {transform_indices = @transform_7, window_bounds = array<i64: 8, 1>}]} {
    %c0 = arith.constant 0 : index
    %c0_0 = arith.constant 0 : index
    %0 = vector.load %arg2[%c0, %c0_0] : memref<8x32xf32, #tpu.memory_space<vmem>>, vector<8x32xf32>
    %c0_1 = arith.constant 0 : index
    %c0_2 = arith.constant 0 : index
    %1 = vector.load %arg3[%c0_1, %c0_2] : memref<32x512xf32, #tpu.memory_space<vmem>>, vector<32x512xf32>
    %cst = arith.constant dense<0.000000e+00> : vector<8x512xf32>
    %2 = tpu.matmul %0, %1, %cst {dimension_numbers = #tpu.dot_dimension_numbers<[1], [0], [0], [1], [0, 0, 1, 1], [], []>} : vector<8x32xf32>, vector<32x512xf32>, vector<8x512xf32> -> vector<8x512xf32>
    %c0_i32 = arith.constant 0 : i32
    %3 = arith.cmpi eq, %arg1, %c0_i32 : i32
    %4 = arith.extui %3 : i1 to i32
    %c0_i32_3 = arith.constant 0 : i32
    %5 = arith.cmpi ne, %4, %c0_i32_3 : i32
    scf.if %5 {
      %c0_8 = arith.constant 0 : index
      %c0_9 = arith.constant 0 : index
      %12 = vector.load %arg10[%c0_8, %c0_9] : memref<8x512xf32, #tpu.memory_space<vmem>>, vector<8x512xf32>
      tpu.vector_store %arg10[%c0_8, %c0_9], %2 {strides = array<i32>} : memref<8x512xf32, #tpu.memory_space<vmem>>, vector<8x512xf32>,
    } else {
    }
    %c0_i32_4 = arith.constant 0 : i32
    %6 = arith.cmpi sgt, %arg1, %c0_i32_4 : i32
    %7 = arith.extui %6 : i1 to i32
    %c0_i32_5 = arith.constant 0 : i32
    %8 = arith.cmpi ne, %7, %c0_i32_5 : i32
    scf.if %8 {
      %c0_8 = arith.constant 0 : index
      %c0_9 = arith.constant 0 : index
      %12 = vector.load %arg10[%c0_8, %c0_9] : memref<8x512xf32, #tpu.memory_space<vmem>>, vector<8x512xf32>
      %13 = arith.addf %12, %2 : vector<8x512xf32>
      %c0_10 = arith.constant 0 : index
      %c0_11 = arith.constant 0 : index
      %14 = vector.load %arg10[%c0_10, %c0_11] : memref<8x512xf32, #tpu.memory_space<vmem>>, vector<8x512xf32>
      tpu.vector_store %arg10[%c0_10, %c0_11], %13 {strides = array<i32>} : memref<8x512xf32, #tpu.memory_space<vmem>>, vector<8x512xf32>,
    } else {
    }
    %c0_i32_6 = arith.constant 0 : i32
    %9 = arith.cmpi eq, %arg1, %c0_i32_6 : i32
    %10 = arith.extui %9 : i1 to i32
    %c0_i32_7 = arith.constant 0 : i32
    %11 = arith.cmpi ne, %10, %c0_i32_7 : i32
    scf.if %11 {
      %c0_8 = arith.constant 0 : index
      %c0_9 = arith.constant 0 : index
      %12 = vector.load %arg10[%c0_8, %c0_9] : memref<8x512xf32, #tpu.memory_space<vmem>>, vector<8x512xf32>
      %c0_10 = arith.constant 0 : index
      %c0_11 = arith.constant 0 : index
      %13 = vector.load %arg4[%c0_10, %c0_11] : memref<1x512xf32, #tpu.memory_space<vmem>>, vector<1x512xf32>
      %14 = vector.broadcast %13 : vector<1x512xf32> to vector<8x512xf32>
      %15 = arith.addf %12, %14 : vector<8x512xf32>
      %cst_12 = arith.constant 0.000000e+00 : f32
      %16 = vector.broadcast %cst_12 : f32 to vector<8x512xf32>
      %17 = arith.maximumf %15, %16 : vector<8x512xf32>
      %c0_13 = arith.constant 0 : index
      %c0_14 = arith.constant 0 : index
      %18 = vector.load %arg5[%c0_13, %c0_14] : memref<512x128xf32, #tpu.memory_space<vmem>>, vector<512x128xf32>
      %cst_15 = arith.constant dense<0.000000e+00> : vector<8x128xf32>
      %19 = tpu.matmul %17, %18, %cst_15 {dimension_numbers = #tpu.dot_dimension_numbers<[1], [0], [0], [1], [0, 0, 1, 1], [], []>} : vector<8x512xf32>, vector<512x128xf32>, vector<8x128xf32> -> vector<8x128xf32>
      %c0_16 = arith.constant 0 : index
      %c0_17 = arith.constant 0 : index
      %20 = vector.load %arg6[%c0_16, %c0_17] : memref<1x128xf32, #tpu.memory_space<vmem>>, vector<1x128xf32>
      %21 = vector.broadcast %20 : vector<1x128xf32> to vector<8x128xf32>
      %22 = arith.addf %19, %21 : vector<8x128xf32>
      %cst_18 = arith.constant 0.000000e+00 : f32
      %23 = vector.broadcast %cst_18 : f32 to vector<8x128xf32>
      %24 = arith.maximumf %22, %23 : vector<8x128xf32>
      %c0_19 = arith.constant 0 : index
      %c0_20 = arith.constant 0 : index
      %25 = vector.load %arg7[%c0_19, %c0_20] : memref<1x128xf32, #tpu.memory_space<vmem>>, vector<1x128xf32>
      %26 = vector.broadcast %25 : vector<1x128xf32> to vector<8x128xf32>
      %27 = arith.mulf %24, %26 : vector<8x128xf32>
      %cst_21 = arith.constant dense<0.000000e+00> : vector<8xf32>
      %28 = vector.multi_reduction <add>, %27, %cst_21 [1] : vector<8x128xf32> to vector<8xf32>
      %29 = vector.shape_cast %28 : vector<8xf32> to vector<8x1xf32>
      %c0_22 = arith.constant 0 : index
      %c0_23 = arith.constant 0 : index
      %30 = vector.load %arg8[%c0_22, %c0_23] : memref<1x1xf32, #tpu.memory_space<vmem>>, vector<1x1xf32>
      %31 = vector.broadcast %30 : vector<1x1xf32> to vector<8x1xf32>
      %32 = arith.addf %29, %31 : vector<8x1xf32>
      %cst_24 = arith.constant 0.000000e+00 : f32
      %33 = vector.broadcast %cst_24 : f32 to vector<8x1xf32>
      %34 = arith.subf %33, %32 : vector<8x1xf32>
      %35 = math.exp %34 : vector<8x1xf32>
      %cst_25 = arith.constant 1.000000e+00 : f32
      %36 = vector.broadcast %cst_25 : f32 to vector<8x1xf32>
      %37 = arith.addf %36, %35 : vector<8x1xf32>
      %cst_26 = arith.constant 1.000000e+00 : f32
      %38 = vector.broadcast %cst_26 : f32 to vector<8x1xf32>
      %39 = arith.divf %38, %37 : vector<8x1xf32>
      %c0_27 = arith.constant 0 : index
      %c0_28 = arith.constant 0 : index
      %40 = vector.load %arg9[%c0_27, %c0_28] : memref<8x1xf32, #tpu.memory_space<vmem>>, vector<8x1xf32>
      tpu.vector_store %arg9[%c0_27, %c0_28], %39 {strides = array<i32>} : memref<8x1xf32, #tpu.memory_space<vmem>>, vector<8x1xf32>,
    } else {
    }
    return
  }
  func.func @transform_0(%arg0: i32, %arg1: i32) -> (i32, i32) {
    %c0_i32 = arith.constant 0 : i32
    return %arg0, %arg1 : i32, i32
  }
  func.func @transform_1(%arg0: i32, %arg1: i32) -> (i32, i32) {
    %c0_i32 = arith.constant 0 : i32
    %c0_i32_0 = arith.constant 0 : i32
    return %arg1, %c0_i32 : i32, i32
  }
  func.func @transform_2(%arg0: i32, %arg1: i32) -> (i32, i32) {
    %c0_i32 = arith.constant 0 : i32
    %c0_i32_0 = arith.constant 0 : i32
    %c0_i32_1 = arith.constant 0 : i32
    return %c0_i32, %c0_i32_0 : i32, i32
  }
  func.func @transform_3(%arg0: i32, %arg1: i32) -> (i32, i32) {
    %c0_i32 = arith.constant 0 : i32
    %c0_i32_0 = arith.constant 0 : i32
    %c0_i32_1 = arith.constant 0 : i32
    return %c0_i32, %c0_i32_0 : i32, i32
  }
  func.func @transform_4(%arg0: i32, %arg1: i32) -> (i32, i32) {
    %c0_i32 = arith.constant 0 : i32
    %c0_i32_0 = arith.constant 0 : i32
    %c0_i32_1 = arith.constant 0 : i32
    return %c0_i32, %c0_i32_0 : i32, i32
  }
  func.func @transform_5(%arg0: i32, %arg1: i32) -> (i32, i32) {
    %c0_i32 = arith.constant 0 : i32
    %c0_i32_0 = arith.constant 0 : i32
    %c0_i32_1 = arith.constant 0 : i32
    return %c0_i32, %c0_i32_0 : i32, i32
  }
  func.func @transform_6(%arg0: i32, %arg1: i32) -> (i32, i32) {
    %c0_i32 = arith.constant 0 : i32
    %c0_i32_0 = arith.constant 0 : i32
    %c0_i32_1 = arith.constant 0 : i32
    return %c0_i32, %c0_i32_0 : i32, i32
  }
  func.func @transform_7(%arg0: i32, %arg1: i32) -> (i32, i32) {
    %c0_i32 = arith.constant 0 : i32
    %c0_i32_0 = arith.constant 0 : i32
    return %arg0, %c0_i32 : i32, i32
  }
}

</mosaic_0001>

<llo_original>
// kernel: tpu_custom_call.1
$region0: #{tpu_custom_call.1}
  #allocation0 [shape = 'u32[]', space=smem, size = 0x4, offset = 0x4, fixed_abs, tag = 'smem constant byte address 0x4 - core index']
  #allocation1 [shape = 'u32[144,128]{1,0:T(1,128)}', space=vmem, size = 0x12000, scoped, tag = 'internal scratch']
  #allocation2 [shape = 'f32[8,512]{1,0:T(8,128)}', space=vmem, size = 0x4000, scoped, tag = 'scratch operand']
  #allocation3 [shape = 'f32[1,1]{1,0:T(1,128)S(1)}', space=vmem, size = 0x200, scoped, tag = 'scoped memory for tpu_custom_call.1']
  %s0 = inlined_call_operand.hbm [shape: f32[8,32], index: 0, kind: input, shape index: {}]
  %s1 = inlined_call_operand.hbm [shape: f32[32,512], index: 1, kind: input, shape index: {}]
  %s2 = inlined_call_operand.vmem [shape: f32[1,512], index: 2, kind: input, shape index: {}]
  %s3 = inlined_call_operand.hbm [shape: f32[512,128], index: 3, kind: input, shape index: {}]
  %s4 = inlined_call_operand.vmem [shape: f32[1,128], index: 4, kind: input, shape index: {}]
  %s5 = inlined_call_operand.vmem [shape: f32[1,128], index: 5, kind: input, shape index: {}]
  %s6 = inlined_call_operand.<no memory space> [shape: f32[1,1], index: 6, kind: input, shape index: {}]
  %s7 = inlined_call_operand.vmem [shape: f32[8,1], index: 7, kind: output, shape index: {}]
  %s8 = sld [smem:[#allocation0]]
  $region62: #{tpu_custom_call.1} parent=0
    _
  %s10 = ssub.s32 1, %s8
  %s11 = scalar_select 0, %s10, %s8
  %v12 = vstv %s6
  %13 = vst [vmem:[#allocation3] sm:$0x1] %v12
  $region1: #{tpu_custom_call.1} parent=0
    #allocation4 [shape = 'u8[4096]{0}', space=vmem, size = 0x1000, scoped, tag = 'input window, operand 0, single buffered']
    #allocation5 [shape = 's32[1]{0}', space=sflag, size = 0x4, scoped, tag = 'scoped memory for tpu_custom_call.1']
    #allocation6 [shape = 'u8[65536]{0}', space=vmem, size = 0x10000, scoped, tag = 'input window, operand 1, single buffered']
    #allocation7 [shape = 's32[1]{0}', space=sflag, size = 0x4, scoped, tag = 'scoped memory for tpu_custom_call.1']
    #allocation8 [shape = 'u8[262144]{0}', space=vmem, size = 0x40000, scoped, tag = 'input window, operand 3, single buffered']
    %14 = vsyncpa [#allocation5], 0
    %15 = vsyncpa [#allocation7], 0
    // Predicated region
    $region2: #{tpu_custom_call.1} parent=1 // pred_check
      _
    $region3: #{tpu_custom_call.1} parent=1 // pred_check_branch
      %17 = sbr.rel (0) target = $region5
    $region4: #{tpu_custom_call.1} parent=1 // pred_region
      %s19 = ssub.s32 128, 128
      %20 = vsyncadd [#allocation5], %s19
      %s22 = sshll.u32 [#allocation4], 4
      %s23 = int_to_ptr.vmem [resolvable:$true] %s22
      %25 = dma.hbm_to_vmem [thread:$0]  %s0, 128, %s23, [#allocation5]
    $region5: #{tpu_custom_call.1} parent=1 // pred_fallthru
      _
    // Predicated region
    $region6: #{tpu_custom_call.1} parent=1 // pred_check
      _
    $region7: #{tpu_custom_call.1} parent=1 // pred_check_branch
      %27 = sbr.rel (0) target = $region9
    $region8: #{tpu_custom_call.1} parent=1 // pred_region
      %s29 = ssub.s32 2048, 2048
      %30 = vsyncadd [#allocation7], %s29
      %s31 = sshll.u32 [#allocation6], 4
      %s32 = int_to_ptr.vmem [resolvable:$true] %s31
      %37 = dma.hbm_to_vmem [thread:$0]  %s1, 2048, %s32, [#allocation7], 512, 512, 32
    $region9: #{tpu_custom_call.1} parent=1 // pred_fallthru
      _
    // Predicated region
    $region10: #{tpu_custom_call.1} parent=1 // pred_check
      _
    $region11: #{tpu_custom_call.1} parent=1 // pred_check_branch
      %39 = sbr.rel (0) target = $region13
    $region12: #{tpu_custom_call.1} parent=1 // pred_region
      _
    $region13: #{tpu_custom_call.1} parent=1 // pred_fallthru
      _
    // Predicated region
    $region14: #{tpu_custom_call.1} parent=1 // pred_check
      _
    $region15: #{tpu_custom_call.1} parent=1 // pred_check_branch
      %41 = sbr.rel (0) target = $region17
    $region16: #{tpu_custom_call.1} parent=1 // pred_region
      %s43 = ssub.s32 8192, 8192
      %44 = vsyncadd [#allocation7], %s43
      %s45 = sshll.u32 [#allocation8], 4
      %s46 = int_to_ptr.vmem [resolvable:$true] %s45
      %51 = dma.hbm_to_vmem [thread:$0]  %s3, 8192, %s46, [#allocation7], 128, 128, 8
    $region17: #{tpu_custom_call.1} parent=1 // pred_fallthru
      _
    // Predicated region
    $region18: #{tpu_custom_call.1} parent=1 // pred_check
      _
    $region19: #{tpu_custom_call.1} parent=1 // pred_check_branch
      %53 = sbr.rel (0) target = $region21
    $region20: #{tpu_custom_call.1} parent=1 // pred_region
      _
    $region21: #{tpu_custom_call.1} parent=1 // pred_fallthru
      _
    // Predicated region
    $region22: #{tpu_custom_call.1} parent=1 // pred_check
      _
    $region23: #{tpu_custom_call.1} parent=1 // pred_check_branch
      %55 = sbr.rel (0) target = $region25
    $region24: #{tpu_custom_call.1} parent=1 // pred_region
      _
    $region25: #{tpu_custom_call.1} parent=1 // pred_fallthru
      _
    // Predicated region
    $region26: #{tpu_custom_call.1} parent=1 // pred_check
      _
    $region27: #{tpu_custom_call.1} parent=1 // pred_check_branch
      %57 = sbr.rel (0) target = $region29
    $region28: #{tpu_custom_call.1} parent=1 // pred_region
      _
    $region29: #{tpu_custom_call.1} parent=1 // pred_fallthru
      _
    // Predicated region
    $region30: #{tpu_custom_call.1} parent=1 // pred_check
      _
    $region31: #{tpu_custom_call.1} parent=1 // pred_check_branch
      %59 = sbr.rel (0) target = $region33
    $region32: #{tpu_custom_call.1} parent=1 // pred_region
      %60 = dma.done [#allocation5], 128
    $region33: #{tpu_custom_call.1} parent=1 // pred_fallthru
      _
    // Predicated region
    $region34: #{tpu_custom_call.1} parent=1 // pred_check
      _
    $region35: #{tpu_custom_call.1} parent=1 // pred_check_branch
      %62 = sbr.rel (0) target = $region37
    $region36: #{tpu_custom_call.1} parent=1 // pred_region
      %63 = dma.done [#allocation7], 2048
    $region37: #{tpu_custom_call.1} parent=1 // pred_fallthru
      _
    // Predicated region
    $region38: #{tpu_custom_call.1} parent=1 // pred_check
      _
    $region39: #{tpu_custom_call.1} parent=1 // pred_check_branch
      %65 = sbr.rel (0) target = $region41
    $region40: #{tpu_custom_call.1} parent=1 // pred_region
      %66 = dma.done [#allocation7], 8192
    $region41: #{tpu_custom_call.1} parent=1 // pred_fallthru
      _
    %v67 = vld [vmem:[#allocation4] sm:$0xff]
    %v68 = vld [vmem:[#allocation6] sm:$0xff]
    %v69 = vld [vmem:[#allocation6 + $0x8] sm:$0xff]
    %v70 = vld [vmem:[#allocation6 + $0x10] sm:$0xff]
    %v71 = vld [vmem:[#allocation6 + $0x18] sm:$0xff]
    %v72 = vld [vmem:[#allocation6 + $0x20] sm:$0xff]
    %v73 = vld [vmem:[#allocation6 + $0x28] sm:$0xff]
    %v74 = vld [vmem:[#allocation6 + $0x30] sm:$0xff]
    %v75 = vld [vmem:[#allocation6 + $0x38] sm:$0xff]
    %v76 = vld [vmem:[#allocation6 + $0x40] sm:$0xff]
    %v77 = vld [vmem:[#allocation6 + $0x48] sm:$0xff]
    %v78 = vld [vmem:[#allocation6 + $0x50] sm:$0xff]
    %v79 = vld [vmem:[#allocation6 + $0x58] sm:$0xff]
    %v80 = vld [vmem:[#allocation6 + $0x60] sm:$0xff]
    %v81 = vld [vmem:[#allocation6 + $0x68] sm:$0xff]
    %v82 = vld [vmem:[#allocation6 + $0x70] sm:$0xff]
    %v83 = vld [vmem:[#allocation6 + $0x78] sm:$0xff]
    %vm84 = vcmask 261120
    %v86 = vsel %vm84, %v67, 0
    %88 = vmatprep.subr.mxu0 0.0
    %89 = vmatpush1.msra.mxu0 0.0
    %90 = vmatprep.subr.mxu0 0.0
    %91 = vmatpush1.msra.mxu0 0.0
    %92 = vmatprep.subr.mxu0 0.0
    %93 = vmatpush1.msra.mxu0 0.0
    %94 = vmatprep.subr.mxu0 0.0
    %95 = vmatpush1.msra.mxu0 0.0
    %96 = vmatprep.subr.mxu0 0.0
    %97 = vmatpush1.msra.mxu0 0.0
    %98 = vmatprep.subr.mxu0 0.0
    %99 = vmatpush1.msra.mxu0 0.0
    %100 = vmatprep.subr.mxu0 0.0
    %101 = vmatpush1.msra.mxu0 0.0
    %102 = vmatprep.subr.mxu0 0.0
    %103 = vmatpush1.msra.mxu0 0.0
    %104 = vmatprep.subr.mxu0 0.0
    %105 = vmatpush1.msra.mxu0 0.0
    %106 = vmatprep.subr.mxu0 0.0
    %107 = vmatpush1.msra.mxu0 0.0
    %108 = vmatprep.subr.mxu0 0.0
    %109 = vmatpush1.msra.mxu0 0.0
    %110 = vmatprep.subr.mxu0 0.0
    %111 = vmatpush1.msra.mxu0 0.0
    %112 = vmatprep.subr.mxu0 %v81
    %113 = vmatpush1.msra.mxu0 %v80
    %114 = vmatprep.subr.mxu0 %v77
    %115 = vmatpush1.msra.mxu0 %v76
    %116 = vmatprep.subr.mxu0 %v73
    %117 = vmatpush1.msra.mxu0 %v72
    %118 = vmatprep.subr.mxu0 %v69
    %119 = vmatpush1.msra.mxu0 %v68
    %120 = vmatprep.subr.mxu0 0.0
    %121 = vmatpush2.msra.mxu0 0.0
    %122 = vmatprep.subr.mxu0 0.0
    %123 = vmatpush2.msra.mxu0 0.0
    %124 = vmatprep.subr.mxu0 0.0
    %125 = vmatpush2.msra.mxu0 0.0
    %126 = vmatprep.subr.mxu0 0.0
    %127 = vmatpush2.msra.mxu0 0.0
    %128 = vmatprep.subr.mxu0 0.0
    %129 = vmatpush2.msra.mxu0 0.0
    %130 = vmatprep.subr.mxu0 0.0
    %131 = vmatpush2.msra.mxu0 0.0
    %132 = vmatprep.subr.mxu0 0.0
    %133 = vmatpush2.msra.mxu0 0.0
    %134 = vmatprep.subr.mxu0 0.0
    %135 = vmatpush2.msra.mxu0 0.0
    %136 = vmatprep.subr.mxu0 0.0
    %137 = vmatpush2.msra.mxu0 0.0
    %138 = vmatprep.subr.mxu0 0.0
    %139 = vmatpush2.msra.mxu0 0.0
    %140 = vmatprep.subr.mxu0 0.0
    %141 = vmatpush2.msra.mxu0 0.0
    %142 = vmatprep.subr.mxu0 0.0
    %143 = vmatpush2.msra.mxu0 0.0
    %144 = vmatprep.subr.mxu0 0.0
    %145 = vmatpush2.msra.mxu0 0.0
    %146 = vmatprep.subr.mxu0 0.0
    %147 = vmatpush2.msra.mxu0 0.0
    %148 = vmatprep.subr.mxu0 0.0
    %149 = vmatpush2.msra.mxu0 0.0
    %150 = vmatprep.subr.mxu0 0.0
    %151 = vmatpush2.msra.mxu0 0.0
    %152 = vmatprep.mubr.f32.mxu0 0.0
    %153 = vmatmul.mubr.f32.gmra.mxu0 %v86
    %v154 = vpop.f32.mrf.mxu0
    %v155 = vadd.f32 0.0, %v154
    %v156 = vpop.f32.mrf.mxu0
    %v157 = vadd.f32 0.0, %v156
    %158 = vdwg.mxu0
    %159 = vmatprep.subr.mxu0 0.0
    %160 = vmatpush1.msra.mxu0 0.0
    %161 = vmatprep.subr.mxu0 0.0
    %162 = vmatpush1.msra.mxu0 0.0
    %163 = vmatprep.subr.mxu0 0.0
    %164 = vmatpush1.msra.mxu0 0.0
    %165 = vmatprep.subr.mxu0 0.0
    %166 = vmatpush1.msra.mxu0 0.0
    %167 = vmatprep.subr.mxu0 0.0
    %168 = vmatpush1.msra.mxu0 0.0
    %169 = vmatprep.subr.mxu0 0.0
    %170 = vmatpush1.msra.mxu0 0.0
    %171 = vmatprep.subr.mxu0 0.0
    %172 = vmatpush1.msra.mxu0 0.0
    %173 = vmatprep.subr.mxu0 0.0
    %174 = vmatpush1.msra.mxu0 0.0
    %175 = vmatprep.subr.mxu0 0.0
    %176 = vmatpush1.msra.mxu0 0.0
    %177 = vmatprep.subr.mxu0 0.0
    %178 = vmatpush1.msra.mxu0 0.0
    %179 = vmatprep.subr.mxu0 0.0
    %180 = vmatpush1.msra.mxu0 0.0
    %181 = vmatprep.subr.mxu0 0.0
    %182 = vmatpush1.msra.mxu0 0.0
    %183 = vmatprep.subr.mxu0 %v83
    %184 = vmatpush1.msra.mxu0 %v82
    %185 = vmatprep.subr.mxu0 %v79
    %186 = vmatpush1.msra.mxu0 %v78
    %187 = vmatprep.subr.mxu0 %v75
    %188 = vmatpush1.msra.mxu0 %v74
    %189 = vmatprep.subr.mxu0 %v71
    %190 = vmatpush1.msra.mxu0 %v70
    %191 = vmatprep.subr.mxu0 0.0
    %192 = vmatpush2.msra.mxu0 0.0
    %193 = vmatprep.subr.mxu0 0.0
    %194 = vmatpush2.msra.mxu0 0.0
    %195 = vmatprep.subr.mxu0 0.0
    %196 = vmatpush2.msra.mxu0 0.0
    %197 = vmatprep.subr.mxu0 0.0
    %198 = vmatpush2.msra.mxu0 0.0
    %199 = vmatprep.subr.mxu0 0.0
    %200 = vmatpush2.msra.mxu0 0.0
    %201 = vmatprep.subr.mxu0 0.0
    %202 = vmatpush2.msra.mxu0 0.0
    %203 = vmatprep.subr.mxu0 0.0
    %204 = vmatpush2.msra.mxu0 0.0
    %205 = vmatprep.subr.mxu0 0.0
    %206 = vmatpush2.msra.mxu0 0.0
    %207 = vmatprep.subr.mxu0 0.0
    %208 = vmatpush2.msra.mxu0 0.0
    %209 = vmatprep.subr.mxu0 0.0
    %210 = vmatpush2.msra.mxu0 0.0
    %211 = vmatprep.subr.mxu0 0.0
    %212 = vmatpush2.msra.mxu0 0.0
    %213 = vmatprep.subr.mxu0 0.0
    %214 = vmatpush2.msra.mxu0 0.0
    %215 = vmatprep.subr.mxu0 0.0
    %216 = vmatpush2.msra.mxu0 0.0
    %217 = vmatprep.subr.mxu0 0.0
    %218 = vmatpush2.msra.mxu0 0.0
    %219 = vmatprep.subr.mxu0 0.0
    %220 = vmatpush2.msra.mxu0 0.0
    %221 = vmatprep.subr.mxu0 0.0
    %222 = vmatpush2.msra.mxu0 0.0
    %223 = vmatprep.mubr.f32.mxu0 0.0
    %224 = vmatmul.mubr.f32.gmra.mxu0 %v86
    %v225 = vpop.f32.mrf.mxu0
    %v226 = vadd.f32 0.0, %v225
    %v227 = vpop.f32.mrf.mxu0
    %v228 = vadd.f32 0.0, %v227
    %229 = vdwg.mxu0
    %p230 = scmp.eq.s32.totalorder 0, 0
    // Predicated region
    $region42: #{tpu_custom_call.1} parent=1 // pred_check
      %p231 = pneg %p230
    $region43: #{tpu_custom_call.1} parent=1 // pred_check_branch
      %233 = sbr.rel (%p231) target = $region45
    $region44: #{tpu_custom_call.1} parent=1 // pred_region
      %234 = vst [vmem:[#allocation2] sm:$0xff] %v155
      %235 = vst [vmem:[#allocation2 + $0x8] sm:$0xff] %v157
      %236 = vst [vmem:[#allocation2 + $0x10] sm:$0xff] %v226
      %237 = vst [vmem:[#allocation2 + $0x18] sm:$0xff] %v228
    $region45: #{tpu_custom_call.1} parent=1 // pred_fallthru
      _
    %p238 = scmp.gt.s32.totalorder 0, 0
    // Predicated region
    $region46: #{tpu_custom_call.1} parent=1 // pred_check
      %p239 = pneg %p238
    $region47: #{tpu_custom_call.1} parent=1 // pred_check_branch
      %241 = sbr.rel (%p239) target = $region49
    $region48: #{tpu_custom_call.1} parent=1 // pred_region
      %v242 = vld [vmem:[#allocation2] sm:$0xff]
      %v243 = vld [vmem:[#allocation2 + $0x8] sm:$0xff]
      %v244 = vld [vmem:[#allocation2 + $0x10] sm:$0xff]
      %v245 = vld [vmem:[#allocation2 + $0x18] sm:$0xff]
      %v246 = vadd.f32 %v242, %v155
      %v247 = vadd.f32 %v243, %v157
      %v248 = vadd.f32 %v244, %v226
      %v249 = vadd.f32 %v245, %v228
      %250 = vst [vmem:[#allocation2] sm:$0xff] %v246
      %251 = vst [vmem:[#allocation2 + $0x8] sm:$0xff] %v247
      %252 = vst [vmem:[#allocation2 + $0x10] sm:$0xff] %v248
      %253 = vst [vmem:[#allocation2 + $0x18] sm:$0xff] %v249
    $region49: #{tpu_custom_call.1} parent=1 // pred_fallthru
      _
    // Predicated region
    $region50: #{tpu_custom_call.1} parent=1 // pred_check
      %p254 = pneg %p230
    $region51: #{tpu_custom_call.1} parent=1 // pred_check_branch
      %256 = sbr.rel (%p254) target = $region53
    $region52: #{tpu_custom_call.1} parent=1 // pred_region
      %v257 = vld [vmem:[#allocation2] sm:$0xff]
      %v258 = vld [vmem:[#allocation2 + $0x8] sm:$0xff]
      %v259 = vld [vmem:[#allocation2 + $0x10] sm:$0xff]
      %v260 = vld [vmem:[#allocation2 + $0x18] sm:$0xff]
      %v261 = vld [vmem:[%s2] sm:$0xf]
      %v263 = vlaneseq
      %v264 = vshrl.u32 %v263, 7
      %v265 = vsub.s32 0, %v264
      %v266 = vrot.slane %v261, %v265
      %v267 = vlaneseq
      %v268 = vshrl.u32 %v267, 7
      %v269 = vsub.s32 1, %v268
      %v270 = vrot.slane %v261, %v269
      %v271 = vlaneseq
      %v272 = vshrl.u32 %v271, 7
      %v273 = vsub.s32 2, %v272
      %v274 = vrot.slane %v261, %v273
      %v275 = vlaneseq
      %v276 = vshrl.u32 %v275, 7
      %v277 = vsub.s32 3, %v276
      %v278 = vrot.slane %v261, %v277
      %v283 = vadd.f32 %v257, %v266
      %v284 = vadd.f32 %v258, %v270
      %v285 = vadd.f32 %v259, %v274
      %v286 = vadd.f32 %v260, %v278
      %v287 = vmax.f32 %v283, 0.0
      %v288 = vmax.f32 %v284, 0.0
      %v289 = vmax.f32 %v285, 0.0
      %v290 = vmax.f32 %v286, 0.0
      %v291 = vld [vmem:[#allocation8] sm:$0xff]
      %v292 = vld [vmem:[#allocation8 + $0x8] sm:$0xff]
      %v293 = vld [vmem:[#allocation8 + $0x10] sm:$0xff]
      %v294 = vld [vmem:[#allocation8 + $0x18] sm:$0xff]
      %v295 = vld [vmem:[#allocation8 + $0x20] sm:$0xff]
      %v296 = vld [vmem:[#allocation8 + $0x28] sm:$0xff]
      %v297 = vld [vmem:[#allocation8 + $0x30] sm:$0xff]
      %v298 = vld [vmem:[#allocation8 + $0x38] sm:$0xff]
      %v299 = vld [vmem:[#allocation8 + $0x40] sm:$0xff]
      %v300 = vld [vmem:[#allocation8 + $0x48] sm:$0xff]
      %v301 = vld [vmem:[#allocation8 + $0x50] sm:$0xff]
      %v302 = vld [vmem:[#allocation8 + $0x58] sm:$0xff]
      %v303 = vld [vmem:[#allocation8 + $0x60] sm:$0xff]
      %v304 = vld [vmem:[#allocation8 + $0x68] sm:$0xff]
      %v305 = vld [vmem:[#allocation8 + $0x70] sm:$0xff]
      %v306 = vld [vmem:[#allocation8 + $0x78] sm:$0xff]
      %v307 = vld [vmem:[#allocation8 + $0x80] sm:$0xff]
      %v308 = vld [vmem:[#allocation8 + $0x88] sm:$0xff]
      %v309 = vld [vmem:[#allocation8 + $0x90] sm:$0xff]
      %v310 = vld [vmem:[#allocation8 + $0x98] sm:$0xff]
      %v311 = vld [vmem:[#allocation8 + $0xa0] sm:$0xff]
      %v312 = vld [vmem:[#allocation8 + $0xa8] sm:$0xff]
      %v313 = vld [vmem:[#allocation8 + $0xb0] sm:$0xff]
      %v314 = vld [vmem:[#allocation8 + $0xb8] sm:$0xff]
      %v315 = vld [vmem:[#allocation8 + $0xc0] sm:$0xff]
      %v316 = vld [vmem:[#allocation8 + $0xc8] sm:$0xff]
      %v317 = vld [vmem:[#allocation8 + $0xd0] sm:$0xff]
      %v318 = vld [vmem:[#allocation8 + $0xd8] sm:$0xff]
      %v319 = vld [vmem:[#allocation8 + $0xe0] sm:$0xff]
      %v320 = vld [vmem:[#allocation8 + $0xe8] sm:$0xff]
      %v321 = vld [vmem:[#allocation8 + $0xf0] sm:$0xff]
      %v322 = vld [vmem:[#allocation8 + $0xf8] sm:$0xff]
      %v323 = vld [vmem:[#allocation8 + $0x100] sm:$0xff]
      %v324 = vld [vmem:[#allocation8 + $0x108] sm:$0xff]
      %v325 = vld [vmem:[#allocation8 + $0x110] sm:$0xff]
      %v326 = vld [vmem:[#allocation8 + $0x118] sm:$0xff]
      %v327 = vld [vmem:[#allocation8 + $0x120] sm:$0xff]
      %v328 = vld [vmem:[#allocation8 + $0x128] sm:$0xff]
      %v329 = vld [vmem:[#allocation8 + $0x130] sm:$0xff]
      %v330 = vld [vmem:[#allocation8 + $0x138] sm:$0xff]
      %v331 = vld [vmem:[#allocation8 + $0x140] sm:$0xff]
      %v332 = vld [vmem:[#allocation8 + $0x148] sm:$0xff]
      %v333 = vld [vmem:[#allocation8 + $0x150] sm:$0xff]
      %v334 = vld [vmem:[#allocation8 + $0x158] sm:$0xff]
      %v335 = vld [vmem:[#allocation8 + $0x160] sm:$0xff]
      %v336 = vld [vmem:[#allocation8 + $0x168] sm:$0xff]
      %v337 = vld [vmem:[#allocation8 + $0x170] sm:$0xff]
      %v338 = vld [vmem:[#allocation8 + $0x178] sm:$0xff]
      %v339 = vld [vmem:[#allocation8 + $0x180] sm:$0xff]
      %v340 = vld [vmem:[#allocation8 + $0x188] sm:$0xff]
      %v341 = vld [vmem:[#allocation8 + $0x190] sm:$0xff]
      %v342 = vld [vmem:[#allocation8 + $0x198] sm:$0xff]
      %v343 = vld [vmem:[#allocation8 + $0x1a0] sm:$0xff]
      %v344 = vld [vmem:[#allocation8 + $0x1a8] sm:$0xff]
      %v345 = vld [vmem:[#allocation8 + $0x1b0] sm:$0xff]
      %v346 = vld [vmem:[#allocation8 + $0x1b8] sm:$0xff]
      %v347 = vld [vmem:[#allocation8 + $0x1c0] sm:$0xff]
      %v348 = vld [vmem:[#allocation8 + $0x1c8] sm:$0xff]
      %v349 = vld [vmem:[#allocation8 + $0x1d0] sm:$0xff]
      %v350 = vld [vmem:[#allocation8 + $0x1d8] sm:$0xff]
      %v351 = vld [vmem:[#allocation8 + $0x1e0] sm:$0xff]
      %v352 = vld [vmem:[#allocation8 + $0x1e8] sm:$0xff]
      %v353 = vld [vmem:[#allocation8 + $0x1f0] sm:$0xff]
      %v354 = vld [vmem:[#allocation8 + $0x1f8] sm:$0xff]
      %v355 = vld [vmem:[%s4] sm:$0x1]
      %v357 = vlaneseq
      %v358 = vshrl.u32 %v357, 7
      %v359 = vsub.s32 0, %v358
      %v360 = vrot.slane %v355, %v359
      %362 = vmatprep.subr.mxu0 0.0
      %363 = vmatpush1.msra.mxu0 %v306
      %364 = vmatprep.subr.mxu0 0.0
      %365 = vmatpush1.msra.mxu0 %v305
      %366 = vmatprep.subr.mxu0 0.0
      %367 = vmatpush1.msra.mxu0 %v304
      %368 = vmatprep.subr.mxu0 0.0
      %369 = vmatpush1.msra.mxu0 %v303
      %370 = vmatprep.subr.mxu0 0.0
      %371 = vmatpush1.msra.mxu0 %v302
      %372 = vmatprep.subr.mxu0 0.0
      %373 = vmatpush1.msra.mxu0 %v301
      %374 = vmatprep.subr.mxu0 0.0
      %375 = vmatpush1.msra.mxu0 %v300
      %376 = vmatprep.subr.mxu0 0.0
      %377 = vmatpush1.msra.mxu0 %v299
      %378 = vmatprep.subr.mxu0 0.0
      %379 = vmatpush1.msra.mxu0 %v298
      %380 = vmatprep.subr.mxu0 0.0
      %381 = vmatpush1.msra.mxu0 %v297
      %382 = vmatprep.subr.mxu0 0.0
      %383 = vmatpush1.msra.mxu0 %v296
      %384 = vmatprep.subr.mxu0 0.0
      %385 = vmatpush1.msra.mxu0 %v295
      %386 = vmatprep.subr.mxu0 0.0
      %387 = vmatpush1.msra.mxu0 %v294
      %388 = vmatprep.subr.mxu0 0.0
      %389 = vmatpush1.msra.mxu0 %v293
      %390 = vmatprep.subr.mxu0 0.0
      %391 = vmatpush1.msra.mxu0 %v292
      %392 = vmatprep.subr.mxu0 0.0
      %393 = vmatpush1.msra.mxu0 %v291
      %394 = vmatprep.subr.mxu0 0.0
      %395 = vmatpush2.msra.mxu0 %v322
      %396 = vmatprep.subr.mxu0 0.0
      %397 = vmatpush2.msra.mxu0 %v321
      %398 = vmatprep.subr.mxu0 0.0
      %399 = vmatpush2.msra.mxu0 %v320
      %400 = vmatprep.subr.mxu0 0.0
      %401 = vmatpush2.msra.mxu0 %v319
      %402 = vmatprep.subr.mxu0 0.0
      %403 = vmatpush2.msra.mxu0 %v318
      %404 = vmatprep.subr.mxu0 0.0
      %405 = vmatpush2.msra.mxu0 %v317
      %406 = vmatprep.subr.mxu0 0.0
      %407 = vmatpush2.msra.mxu0 %v316
      %408 = vmatprep.subr.mxu0 0.0
      %409 = vmatpush2.msra.mxu0 %v315
      %410 = vmatprep.subr.mxu0 0.0
      %411 = vmatpush2.msra.mxu0 %v314
      %412 = vmatprep.subr.mxu0 0.0
      %413 = vmatpush2.msra.mxu0 %v313
      %414 = vmatprep.subr.mxu0 0.0
      %415 = vmatpush2.msra.mxu0 %v312
      %416 = vmatprep.subr.mxu0 0.0
      %417 = vmatpush2.msra.mxu0 %v311
      %418 = vmatprep.subr.mxu0 0.0
      %419 = vmatpush2.msra.mxu0 %v310
      %420 = vmatprep.subr.mxu0 0.0
      %421 = vmatpush2.msra.mxu0 %v309
      %422 = vmatprep.subr.mxu0 0.0
      %423 = vmatpush2.msra.mxu0 %v308
      %424 = vmatprep.subr.mxu0 0.0
      %425 = vmatpush2.msra.mxu0 %v307
      %426 = vmatprep.mubr.f32.mxu0 %v288
      %427 = vmatmul.mubr.f32.gmra.mxu0 %v287
      %v428 = vpop.f32.mrf.mxu0
      %v429 = vadd.f32 %v360, %v428
      %v430 = vpop.f32.mrf.mxu0
      %431 = vdwg.mxu0
      %432 = vmatprep.subr.mxu0 0.0
      %433 = vmatpush1.msra.mxu0 %v338
      %434 = vmatprep.subr.mxu0 0.0
      %435 = vmatpush1.msra.mxu0 %v337
      %436 = vmatprep.subr.mxu0 0.0
      %437 = vmatpush1.msra.mxu0 %v336
      %438 = vmatprep.subr.mxu0 0.0
      %439 = vmatpush1.msra.mxu0 %v335
      %440 = vmatprep.subr.mxu0 0.0
      %441 = vmatpush1.msra.mxu0 %v334
      %442 = vmatprep.subr.mxu0 0.0
      %443 = vmatpush1.msra.mxu0 %v333
      %444 = vmatprep.subr.mxu0 0.0
      %445 = vmatpush1.msra.mxu0 %v332
      %446 = vmatprep.subr.mxu0 0.0
      %447 = vmatpush1.msra.mxu0 %v331
      %448 = vmatprep.subr.mxu0 0.0
      %449 = vmatpush1.msra.mxu0 %v330
      %450 = vmatprep.subr.mxu0 0.0
      %451 = vmatpush1.msra.mxu0 %v329
      %452 = vmatprep.subr.mxu0 0.0
      %453 = vmatpush1.msra.mxu0 %v328
      %454 = vmatprep.subr.mxu0 0.0
      %455 = vmatpush1.msra.mxu0 %v327
      %456 = vmatprep.subr.mxu0 0.0
      %457 = vmatpush1.msra.mxu0 %v326
      %458 = vmatprep.subr.mxu0 0.0
      %459 = vmatpush1.msra.mxu0 %v325
      %460 = vmatprep.subr.mxu0 0.0
      %461 = vmatpush1.msra.mxu0 %v324
      %462 = vmatprep.subr.mxu0 0.0
      %463 = vmatpush1.msra.mxu0 %v323
      %464 = vmatprep.subr.mxu0 0.0
      %465 = vmatpush2.msra.mxu0 %v354
      %466 = vmatprep.subr.mxu0 0.0
      %467 = vmatpush2.msra.mxu0 %v353
      %468 = vmatprep.subr.mxu0 0.0
      %469 = vmatpush2.msra.mxu0 %v352
      %470 = vmatprep.subr.mxu0 0.0
      %471 = vmatpush2.msra.mxu0 %v351
      %472 = vmatprep.subr.mxu0 0.0
      %473 = vmatpush2.msra.mxu0 %v350
      %474 = vmatprep.subr.mxu0 0.0
      %475 = vmatpush2.msra.mxu0 %v349
      %476 = vmatprep.subr.mxu0 0.0
      %477 = vmatpush2.msra.mxu0 %v348
      %478 = vmatprep.subr.mxu0 0.0
      %479 = vmatpush2.msra.mxu0 %v347
      %480 = vmatprep.subr.mxu0 0.0
      %481 = vmatpush2.msra.mxu0 %v346
      %482 = vmatprep.subr.mxu0 0.0
      %483 = vmatpush2.msra.mxu0 %v345
      %484 = vmatprep.subr.mxu0 0.0
      %485 = vmatpush2.msra.mxu0 %v344
      %486 = vmatprep.subr.mxu0 0.0
      %487 = vmatpush2.msra.mxu0 %v343
      %488 = vmatprep.subr.mxu0 0.0
      %489 = vmatpush2.msra.mxu0 %v342
      %490 = vmatprep.subr.mxu0 0.0
      %491 = vmatpush2.msra.mxu0 %v341
      %492 = vmatprep.subr.mxu0 0.0
      %493 = vmatpush2.msra.mxu0 %v340
      %494 = vmatprep.subr.mxu0 0.0
      %495 = vmatpush2.msra.mxu0 %v339
      %496 = vmatprep.mubr.f32.mxu0 %v290
      %497 = vmatmul.mubr.f32.gmra.mxu0 %v289
      %v498 = vpop.f32.mrf.mxu0
      %v499 = vadd.f32 %v429, %v498
      %v500 = vpop.f32.mrf.mxu0
      %501 = vdwg.mxu0
      %v502 = vmax.f32 %v499, 0.0
      %v503 = vld [vmem:[%s5] sm:$0x1]
      %v505 = vlaneseq
      %v506 = vshrl.u32 %v505, 7
      %v507 = vsub.s32 0, %v506
      %v508 = vrot.slane %v503, %v507
      %v510 = vmul.f32 %v502, %v508
      %511 = vadd.xlane.f32.xlu0 %v510
      %v512 = vpop.xlane.xlu0 %511
      %v513 = vld [vmem:[#allocation3] sm:$0x1]
      %v515 = vlaneseq
      %v516 = vshrl.u32 %v515, 7
      %v517 = vsub.s32 0, %v516
      %v518 = vrot.slane %v513, %v517
      %v520 = vadd.f32 %v512, %v518
      %v521 = vsub.f32 0.0, %v520
      %v522 = vmul.f32 %v521, 1.442695
      %v523 = vpow.pop %v522
      %v524 = vadd.f32 %v523, 1.0
      %v525 = vrcp.pop %v524
      %v526 = vmul.f32 1.0, %v525
      %vm527 = vcmask 7168
      %528 = vst.msk [vmem:[%s7] sm:$0xff] %vm527, %v526
    $region53: #{tpu_custom_call.1} parent=1 // pred_fallthru
      _
    // Predicated region
    $region54: #{tpu_custom_call.1} parent=1 // pred_check
      _
    $region55: #{tpu_custom_call.1} parent=1 // pred_check_branch
      %530 = sbr.rel (0) target = $region57
    $region56: #{tpu_custom_call.1} parent=1 // pred_region
      _
    $region57: #{tpu_custom_call.1} parent=1 // pred_fallthru
      _
    // Predicated region
    $region58: #{tpu_custom_call.1} parent=1 // pred_check
      _
    $region59: #{tpu_custom_call.1} parent=1 // pred_check_branch
      %532 = sbr.rel (0) target = $region61
    $region60: #{tpu_custom_call.1} parent=1 // pred_region
      _
    $region61: #{tpu_custom_call.1} parent=1 // pred_fallthru
      _
    %533 = vsyncpa [#allocation5], 1
    %534 = vsyncpa [#allocation7], 1

// kernel: tpu_custom_call.1
$region0: #{tpu_custom_call.1}
  #allocation0 [shape = 'u32[]', space=smem, size = 0x4, offset = 0x4, fixed_abs, tag = 'smem constant byte address 0x4 - core index']
  #allocation1 [shape = 'u32[144,128]{1,0:T(1,128)}', space=vmem, size = 0x12000, scoped, tag = 'internal scratch']
  #allocation2 [shape = 'f32[8,512]{1,0:T(8,128)}', space=vmem, size = 0x4000, scoped, tag = 'scratch operand']
  #allocation3 [shape = 'f32[1,1]{1,0:T(1,128)S(1)}', space=vmem, size = 0x200, scoped, tag = 'scoped memory for tpu_custom_call.1']
  %s0 = inlined_call_operand.hbm [shape: f32[8,32], index: 0, kind: input, shape index: {}]
  %s1 = inlined_call_operand.hbm [shape: f32[32,512], index: 1, kind: input, shape index: {}]
  %s2 = inlined_call_operand.vmem [shape: f32[1,512], index: 2, kind: input, shape index: {}]
  %s3 = inlined_call_operand.hbm [shape: f32[512,128], index: 3, kind: input, shape index: {}]
  %s4 = inlined_call_operand.vmem [shape: f32[1,128], index: 4, kind: input, shape index: {}]
  %s5 = inlined_call_operand.vmem [shape: f32[1,128], index: 5, kind: input, shape index: {}]
  %s6 = inlined_call_operand.<no memory space> [shape: f32[1,1], index: 6, kind: input, shape index: {}]
  %s7 = inlined_call_operand.vmem [shape: f32[8,1], index: 7, kind: output, shape index: {}]
  %s8 = sld [smem:[#allocation0]]
  $region62: #{tpu_custom_call.1} parent=0
    _
  %s10 = ssub.s32 1, %s8
  %s11 = scalar_select 0, %s10, %s8
  %v12 = vstv %s6
  %13 = vst [vmem:[#allocation3] sm:$0x1] %v12
  $region1: #{tpu_custom_call.1} parent=0
    #allocation4 [shape = 'u8[4096]{0}', space=vmem, size = 0x1000, scoped, tag = 'input window, operand 0, single buffered']
    #allocation5 [shape = 's32[1]{0}', space=sflag, size = 0x4, scoped, tag = 'scoped memory for tpu_custom_call.1']
    #allocation6 [shape = 'u8[65536]{0}', space=vmem, size = 0x10000, scoped, tag = 'input window, operand 1, single buffered']
    #allocation7 [shape = 's32[1]{0}', space=sflag, size = 0x4, scoped, tag = 'scoped memory for tpu_custom_call.1']
    #allocation8 [shape = 'u8[262144]{0}', space=vmem, size = 0x40000, scoped, tag = 'input window, operand 3, single buffered']
    %14 = vsyncpa [#allocation5], 0
    %15 = vsyncpa [#allocation7], 0
    // Predicated region
    $region2: #{tpu_custom_call.1} parent=1 // pred_check
      _
    $region3: #{tpu_custom_call.1} parent=1 // pred_check_branch
      %17 = sbr.rel (0) target = $region5
    $region4: #{tpu_custom_call.1} parent=1 // pred_region
      %s19 = ssub.s32 128, 128
      %20 = vsyncadd [#allocation5], %s19
      %s22 = sshll.u32 [#allocation4], 4
      %s23 = int_to_ptr.vmem [resolvable:$true] %s22
      %25 = dma.hbm_to_vmem [thread:$0]  %s0, 128, %s23, [#allocation5]
    $region5: #{tpu_custom_call.1} parent=1 // pred_fallthru
      _
    // Predicated region
    $region6: #{tpu_custom_call.1} parent=1 // pred_check
      _
    $region7: #{tpu_custom_call.1} parent=1 // pred_check_branch
      %27 = sbr.rel (0) target = $region9
    $region8: #{tpu_custom_call.1} parent=1 // pred_region
      %s29 = ssub.s32 2048, 2048
      %30 = vsyncadd [#allocation7], %s29
      %s31 = sshll.u32 [#allocation6], 4
      %s32 = int_to_ptr.vmem [resolvable:$true] %s31
      %37 = dma.hbm_to_vmem [thread:$0]  %s1, 2048, %s32, [#allocation7], 512, 512, 32
    $region9: #{tpu_custom_call.1} parent=1 // pred_fallthru
      _
    // Predicated region
    $region10: #{tpu_custom_call.1} parent=1 // pred_check
      _
    $region11: #{tpu_custom_call.1} parent=1 // pred_check_branch
      %39 = sbr.rel (0) target = $region13
    $region12: #{tpu_custom_call.1} parent=1 // pred_region
      _
    $region13: #{tpu_custom_call.1} parent=1 // pred_fallthru
      _
    // Predicated region
    $region14: #{tpu_custom_call.1} parent=1 // pred_check
      _
    $region15: #{tpu_custom_call.1} parent=1 // pred_check_branch
      %41 = sbr.rel (0) target = $region17
    $region16: #{tpu_custom_call.1} parent=1 // pred_region
      %s43 = ssub.s32 8192, 8192
      %44 = vsyncadd [#allocation7], %s43
      %s45 = sshll.u32 [#allocation8], 4
      %s46 = int_to_ptr.vmem [resolvable:$true] %s45
      %51 = dma.hbm_to_vmem [thread:$0]  %s3, 8192, %s46, [#allocation7], 128, 128, 8
    $region17: #{tpu_custom_call.1} parent=1 // pred_fallthru
      _
    // Predicated region
    $region18: #{tpu_custom_call.1} parent=1 // pred_check
      _
    $region19: #{tpu_custom_call.1} parent=1 // pred_check_branch
      %53 = sbr.rel (0) target = $region21
    $region20: #{tpu_custom_call.1} parent=1 // pred_region
      _
    $region21: #{tpu_custom_call.1} parent=1 // pred_fallthru
      _
    // Predicated region
    $region22: #{tpu_custom_call.1} parent=1 // pred_check
      _
    $region23: #{tpu_custom_call.1} parent=1 // pred_check_branch
      %55 = sbr.rel (0) target = $region25
    $region24: #{tpu_custom_call.1} parent=1 // pred_region
      _
    $region25: #{tpu_custom_call.1} parent=1 // pred_fallthru
      _
    // Predicated region
    $region26: #{tpu_custom_call.1} parent=1 // pred_check
      _
    $region27: #{tpu_custom_call.1} parent=1 // pred_check_branch
      %57 = sbr.rel (0) target = $region29
    $region28: #{tpu_custom_call.1} parent=1 // pred_region
      _
    $region29: #{tpu_custom_call.1} parent=1 // pred_fallthru
      _
    // Predicated region
    $region30: #{tpu_custom_call.1} parent=1 // pred_check
      _
    $region31: #{tpu_custom_call.1} parent=1 // pred_check_branch
      %59 = sbr.rel (0) target = $region33
    $region32: #{tpu_custom_call.1} parent=1 // pred_region
      %60 = dma.done [#allocation5], 128
    $region33: #{tpu_custom_call.1} parent=1 // pred_fallthru
      _
    // Predicated region
    $region34: #{tpu_custom_call.1} parent=1 // pred_check
      _
    $region35: #{tpu_custom_call.1} parent=1 // pred_check_branch
      %62 = sbr.rel (0) target = $region37
    $region36: #{tpu_custom_call.1} parent=1 // pred_region
      %63 = dma.done [#allocation7], 2048
    $region37: #{tpu_custom_call.1} parent=1 // pred_fallthru
      _
    // Predicated region
    $region38: #{tpu_custom_call.1} parent=1 // pred_check
      _
    $region39: #{tpu_custom_call.1} parent=1 // pred_check_branch
      %65 = sbr.rel (0) target = $region41
    $region40: #{tpu_custom_call.1} parent=1 // pred_region
      %66 = dma.done [#allocation7], 8192
    $region41: #{tpu_custom_call.1} parent=1 // pred_fallthru
      _
    %v67 = vld [vmem:[#allocation4] sm:$0xff]
    %v68 = vld [vmem:[#allocation6] sm:$0xff]
    %v69 = vld [vmem:[#allocation6 + $0x8] sm:$0xff]
    %v70 = vld [vmem:[#allocation6 + $0x10] sm:$0xff]
    %v71 = vld [vmem:[#allocation6 + $0x18] sm:$0xff]
    %v72 = vld [vmem:[#allocation6 + $0x20] sm:$0xff]
    %v73 = vld [vmem:[#allocation6 + $0x28] sm:$0xff]
    %v74 = vld [vmem:[#allocation6 + $0x30] sm:$0xff]
    %v75 = vld [vmem:[#allocation6 + $0x38] sm:$0xff]
    %v76 = vld [vmem:[#allocation6 + $0x40] sm:$0xff]
    %v77 = vld [vmem:[#allocation6 + $0x48] sm:$0xff]
    %v78 = vld [vmem:[#allocation6 + $0x50] sm:$0xff]
    %v79 = vld [vmem:[#allocation6 + $0x58] sm:$0xff]
    %v80 = vld [vmem:[#allocation6 + $0x60] sm:$0xff]
    %v81 = vld [vmem:[#allocation6 + $0x68] sm:$0xff]
    %v82 = vld [vmem:[#allocation6 + $0x70] sm:$0xff]
    %v83 = vld [vmem:[#allocation6 + $0x78] sm:$0xff]
    %vm84 = vcmask 261120
    %v86 = vsel %vm84, %v67, 0
    %88 = vmatprep.subr.mxu0 0.0
    %89 = vmatpush1.msra.mxu0 0.0
    %90 = vmatprep.subr.mxu0 0.0
    %91 = vmatpush1.msra.mxu0 0.0
    %92 = vmatprep.subr.mxu0 0.0
    %93 = vmatpush1.msra.mxu0 0.0
    %94 = vmatprep.subr.mxu0 0.0
    %95 = vmatpush1.msra.mxu0 0.0
    %96 = vmatprep.subr.mxu0 0.0
    %97 = vmatpush1.msra.mxu0 0.0
    %98 = vmatprep.subr.mxu0 0.0
    %99 = vmatpush1.msra.mxu0 0.0
    %100 = vmatprep.subr.mxu0 0.0
    %101 = vmatpush1.msra.mxu0 0.0
    %102 = vmatprep.subr.mxu0 0.0
    %103 = vmatpush1.msra.mxu0 0.0
    %104 = vmatprep.subr.mxu0 0.0
    %105 = vmatpush1.msra.mxu0 0.0
    %106 = vmatprep.subr.mxu0 0.0
    %107 = vmatpush1.msra.mxu0 0.0
    %108 = vmatprep.subr.mxu0 0.0
    %109 = vmatpush1.msra.mxu0 0.0
    %110 = vmatprep.subr.mxu0 0.0
    %111 = vmatpush1.msra.mxu0 0.0
    %112 = vmatprep.subr.mxu0 %v81
    %113 = vmatpush1.msra.mxu0 %v80
    %114 = vmatprep.subr.mxu0 %v77
    %115 = vmatpush1.msra.mxu0 %v76
    %116 = vmatprep.subr.mxu0 %v73
    %117 = vmatpush1.msra.mxu0 %v72
    %118 = vmatprep.subr.mxu0 %v69
    %119 = vmatpush1.msra.mxu0 %v68
    %120 = vmatprep.subr.mxu0 0.0
    %121 = vmatpush2.msra.mxu0 0.0
    %122 = vmatprep.subr.mxu0 0.0
    %123 = vmatpush2.msra.mxu0 0.0
    %124 = vmatprep.subr.mxu0 0.0
    %125 = vmatpush2.msra.mxu0 0.0
    %126 = vmatprep.subr.mxu0 0.0
    %127 = vmatpush2.msra.mxu0 0.0
    %128 = vmatprep.subr.mxu0 0.0
    %129 = vmatpush2.msra.mxu0 0.0
    %130 = vmatprep.subr.mxu0 0.0
    %131 = vmatpush2.msra.mxu0 0.0
    %132 = vmatprep.subr.mxu0 0.0
    %133 = vmatpush2.msra.mxu0 0.0
    %134 = vmatprep.subr.mxu0 0.0
    %135 = vmatpush2.msra.mxu0 0.0
    %136 = vmatprep.subr.mxu0 0.0
    %137 = vmatpush2.msra.mxu0 0.0
    %138 = vmatprep.subr.mxu0 0.0
    %139 = vmatpush2.msra.mxu0 0.0
    %140 = vmatprep.subr.mxu0 0.0
    %141 = vmatpush2.msra.mxu0 0.0
    %142 = vmatprep.subr.mxu0 0.0
    %143 = vmatpush2.msra.mxu0 0.0
    %144 = vmatprep.subr.mxu0 0.0
    %145 = vmatpush2.msra.mxu0 0.0
    %146 = vmatprep.subr.mxu0 0.0
    %147 = vmatpush2.msra.mxu0 0.0
    %148 = vmatprep.subr.mxu0 0.0
    %149 = vmatpush2.msra.mxu0 0.0
    %150 = vmatprep.subr.mxu0 0.0
    %151 = vmatpush2.msra.mxu0 0.0
    %152 = vmatprep.mubr.f32.mxu0 0.0
    %153 = vmatmul.mubr.f32.gmra.mxu0 %v86
    %v154 = vpop.f32.mrf.mxu0
    %v155 = vadd.f32 0.0, %v154
    %v156 = vpop.f32.mrf.mxu0
    %v157 = vadd.f32 0.0, %v156
    %158 = vdwg.mxu0
    %159 = vmatprep.subr.mxu0 0.0
    %160 = vmatpush1.msra.mxu0 0.0
    %161 = vmatprep.subr.mxu0 0.0
    %162 = vmatpush1.msra.mxu0 0.0
    %163 = vmatprep.subr.mxu0 0.0
    %164 = vmatpush1.msra.mxu0 0.0
    %165 = vmatprep.subr.mxu0 0.0
    %166 = vmatpush1.msra.mxu0 0.0
    %167 = vmatprep.subr.mxu0 0.0
    %168 = vmatpush1.msra.mxu0 0.0
    %169 = vmatprep.subr.mxu0 0.0
    %170 = vmatpush1.msra.mxu0 0.0
    %171 = vmatprep.subr.mxu0 0.0
    %172 = vmatpush1.msra.mxu0 0.0
    %173 = vmatprep.subr.mxu0 0.0
    %174 = vmatpush1.msra.mxu0 0.0
    %175 = vmatprep.subr.mxu0 0.0
    %176 = vmatpush1.msra.mxu0 0.0
    %177 = vmatprep.subr.mxu0 0.0
    %178 = vmatpush1.msra.mxu0 0.0
    %179 = vmatprep.subr.mxu0 0.0
    %180 = vmatpush1.msra.mxu0 0.0
    %181 = vmatprep.subr.mxu0 0.0
    %182 = vmatpush1.msra.mxu0 0.0
    %183 = vmatprep.subr.mxu0 %v83
    %184 = vmatpush1.msra.mxu0 %v82
    %185 = vmatprep.subr.mxu0 %v79
    %186 = vmatpush1.msra.mxu0 %v78
    %187 = vmatprep.subr.mxu0 %v75
    %188 = vmatpush1.msra.mxu0 %v74
    %189 = vmatprep.subr.mxu0 %v71
    %190 = vmatpush1.msra.mxu0 %v70
    %191 = vmatprep.subr.mxu0 0.0
    %192 = vmatpush2.msra.mxu0 0.0
    %193 = vmatprep.subr.mxu0 0.0
    %194 = vmatpush2.msra.mxu0 0.0
    %195 = vmatprep.subr.mxu0 0.0
    %196 = vmatpush2.msra.mxu0 0.0
    %197 = vmatprep.subr.mxu0 0.0
    %198 = vmatpush2.msra.mxu0 0.0
    %199 = vmatprep.subr.mxu0 0.0
    %200 = vmatpush2.msra.mxu0 0.0
    %201 = vmatprep.subr.mxu0 0.0
    %202 = vmatpush2.msra.mxu0 0.0
    %203 = vmatprep.subr.mxu0 0.0
    %204 = vmatpush2.msra.mxu0 0.0
    %205 = vmatprep.subr.mxu0 0.0
    %206 = vmatpush2.msra.mxu0 0.0
    %207 = vmatprep.subr.mxu0 0.0
    %208 = vmatpush2.msra.mxu0 0.0
    %209 = vmatprep.subr.mxu0 0.0
    %210 = vmatpush2.msra.mxu0 0.0
    %211 = vmatprep.subr.mxu0 0.0
    %212 = vmatpush2.msra.mxu0 0.0
    %213 = vmatprep.subr.mxu0 0.0
    %214 = vmatpush2.msra.mxu0 0.0
    %215 = vmatprep.subr.mxu0 0.0
    %216 = vmatpush2.msra.mxu0 0.0
    %217 = vmatprep.subr.mxu0 0.0
    %218 = vmatpush2.msra.mxu0 0.0
    %219 = vmatprep.subr.mxu0 0.0
    %220 = vmatpush2.msra.mxu0 0.0
    %221 = vmatprep.subr.mxu0 0.0
    %222 = vmatpush2.msra.mxu0 0.0
    %223 = vmatprep.mubr.f32.mxu0 0.0
    %224 = vmatmul.mubr.f32.gmra.mxu0 %v86
    %v225 = vpop.f32.mrf.mxu0
    %v226 = vadd.f32 0.0, %v225
    %v227 = vpop.f32.mrf.mxu0
    %v228 = vadd.f32 0.0, %v227
    %229 = vdwg.mxu0
    %p230 = scmp.eq.s32.totalorder 0, 0
    // Predicated region
    $region42: #{tpu_custom_call.1} parent=1 // pred_check
      %p231 = pneg %p230
    $region43: #{tpu_custom_call.1} parent=1 // pred_check_branch
      %233 = sbr.rel (%p231) target = $region45
    $region44: #{tpu_custom_call.1} parent=1 // pred_region
      %234 = vst [vmem:[#allocation2] sm:$0xff] %v155
      %235 = vst [vmem:[#allocation2 + $0x8] sm:$0xff] %v157
      %236 = vst [vmem:[#allocation2 + $0x10] sm:$0xff] %v226
      %237 = vst [vmem:[#allocation2 + $0x18] sm:$0xff] %v228
    $region45: #{tpu_custom_call.1} parent=1 // pred_fallthru
      _
    %p238 = scmp.gt.s32.totalorder 0, 0
    // Predicated region
    $region46: #{tpu_custom_call.1} parent=1 // pred_check
      %p239 = pneg %p238
    $region47: #{tpu_custom_call.1} parent=1 // pred_check_branch
      %241 = sbr.rel (%p239) target = $region49
    $region48: #{tpu_custom_call.1} parent=1 // pred_region
      %v242 = vld [vmem:[#allocation2] sm:$0xff]
      %v243 = vld [vmem:[#allocation2 + $0x8] sm:$0xff]
      %v244 = vld [vmem:[#allocation2 + $0x10] sm:$0xff]
      %v245 = vld [vmem:[#allocation2 + $0x18] sm:$0xff]
      %v246 = vadd.f32 %v242, %v155
      %v247 = vadd.f32 %v243, %v157
      %v248 = vadd.f32 %v244, %v226
      %v249 = vadd.f32 %v245, %v228
      %250 = vst [vmem:[#allocation2] sm:$0xff] %v246
      %251 = vst [vmem:[#allocation2 + $0x8] sm:$0xff] %v247
      %252 = vst [vmem:[#allocation2 + $0x10] sm:$0xff] %v248
      %253 = vst [vmem:[#allocation2 + $0x18] sm:$0xff] %v249
    $region49: #{tpu_custom_call.1} parent=1 // pred_fallthru
      _
    // Predicated region
    $region50: #{tpu_custom_call.1} parent=1 // pred_check
      %p254 = pneg %p230
    $region51: #{tpu_custom_call.1} parent=1 // pred_check_branch
      %256 = sbr.rel (%p254) target = $region53
    $region52: #{tpu_custom_call.1} parent=1 // pred_region
      %v257 = vld [vmem:[#allocation2] sm:$0xff]
      %v258 = vld [vmem:[#allocation2 + $0x8] sm:$0xff]
      %v259 = vld [vmem:[#allocation2 + $0x10] sm:$0xff]
      %v260 = vld [vmem:[#allocation2 + $0x18] sm:$0xff]
      %v261 = vld [vmem:[%s2] sm:$0xf]
      %v263 = vlaneseq
      %v264 = vshrl.u32 %v263, 7
      %v265 = vsub.s32 0, %v264
      %v266 = vrot.slane %v261, %v265
      %v267 = vlaneseq
      %v268 = vshrl.u32 %v267, 7
      %v269 = vsub.s32 1, %v268
      %v270 = vrot.slane %v261, %v269
      %v271 = vlaneseq
      %v272 = vshrl.u32 %v271, 7
      %v273 = vsub.s32 2, %v272
      %v274 = vrot.slane %v261, %v273
      %v275 = vlaneseq
      %v276 = vshrl.u32 %v275, 7
      %v277 = vsub.s32 3, %v276
      %v278 = vrot.slane %v261, %v277
      %v283 = vadd.f32 %v257, %v266
      %v284 = vadd.f32 %v258, %v270
      %v285 = vadd.f32 %v259, %v274
      %v286 = vadd.f32 %v260, %v278
      %v287 = vmax.f32 %v283, 0.0
      %v288 = vmax.f32 %v284, 0.0
      %v289 = vmax.f32 %v285, 0.0
      %v290 = vmax.f32 %v286, 0.0
      %v291 = vld [vmem:[#allocation8] sm:$0xff]
      %v292 = vld [vmem:[#allocation8 + $0x8] sm:$0xff]
      %v293 = vld [vmem:[#allocation8 + $0x10] sm:$0xff]
      %v294 = vld [vmem:[#allocation8 + $0x18] sm:$0xff]
      %v295 = vld [vmem:[#allocation8 + $0x20] sm:$0xff]
      %v296 = vld [vmem:[#allocation8 + $0x28] sm:$0xff]
      %v297 = vld [vmem:[#allocation8 + $0x30] sm:$0xff]
      %v298 = vld [vmem:[#allocation8 + $0x38] sm:$0xff]
      %v299 = vld [vmem:[#allocation8 + $0x40] sm:$0xff]
      %v300 = vld [vmem:[#allocation8 + $0x48] sm:$0xff]
      %v301 = vld [vmem:[#allocation8 + $0x50] sm:$0xff]
      %v302 = vld [vmem:[#allocation8 + $0x58] sm:$0xff]
      %v303 = vld [vmem:[#allocation8 + $0x60] sm:$0xff]
      %v304 = vld [vmem:[#allocation8 + $0x68] sm:$0xff]
      %v305 = vld [vmem:[#allocation8 + $0x70] sm:$0xff]
      %v306 = vld [vmem:[#allocation8 + $0x78] sm:$0xff]
      %v307 = vld [vmem:[#allocation8 + $0x80] sm:$0xff]
      %v308 = vld [vmem:[#allocation8 + $0x88] sm:$0xff]
      %v309 = vld [vmem:[#allocation8 + $0x90] sm:$0xff]
      %v310 = vld [vmem:[#allocation8 + $0x98] sm:$0xff]
      %v311 = vld [vmem:[#allocation8 + $0xa0] sm:$0xff]
      %v312 = vld [vmem:[#allocation8 + $0xa8] sm:$0xff]
      %v313 = vld [vmem:[#allocation8 + $0xb0] sm:$0xff]
      %v314 = vld [vmem:[#allocation8 + $0xb8] sm:$0xff]
      %v315 = vld [vmem:[#allocation8 + $0xc0] sm:$0xff]
      %v316 = vld [vmem:[#allocation8 + $0xc8] sm:$0xff]
      %v317 = vld [vmem:[#allocation8 + $0xd0] sm:$0xff]
      %v318 = vld [vmem:[#allocation8 + $0xd8] sm:$0xff]
      %v319 = vld [vmem:[#allocation8 + $0xe0] sm:$0xff]
      %v320 = vld [vmem:[#allocation8 + $0xe8] sm:$0xff]
      %v321 = vld [vmem:[#allocation8 + $0xf0] sm:$0xff]
      %v322 = vld [vmem:[#allocation8 + $0xf8] sm:$0xff]
      %v323 = vld [vmem:[#allocation8 + $0x100] sm:$0xff]
      %v324 = vld [vmem:[#allocation8 + $0x108] sm:$0xff]
      %v325 = vld [vmem:[#allocation8 + $0x110] sm:$0xff]
      %v326 = vld [vmem:[#allocation8 + $0x118] sm:$0xff]
      %v327 = vld [vmem:[#allocation8 + $0x120] sm:$0xff]
      %v328 = vld [vmem:[#allocation8 + $0x128] sm:$0xff]
      %v329 = vld [vmem:[#allocation8 + $0x130] sm:$0xff]
      %v330 = vld [vmem:[#allocation8 + $0x138] sm:$0xff]
      %v331 = vld [vmem:[#allocation8 + $0x140] sm:$0xff]
      %v332 = vld [vmem:[#allocation8 + $0x148] sm:$0xff]
      %v333 = vld [vmem:[#allocation8 + $0x150] sm:$0xff]
      %v334 = vld [vmem:[#allocation8 + $0x158] sm:$0xff]
      %v335 = vld [vmem:[#allocation8 + $0x160] sm:$0xff]
      %v336 = vld [vmem:[#allocation8 + $0x168] sm:$0xff]
      %v337 = vld [vmem:[#allocation8 + $0x170] sm:$0xff]
      %v338 = vld [vmem:[#allocation8 + $0x178] sm:$0xff]
      %v339 = vld [vmem:[#allocation8 + $0x180] sm:$0xff]
      %v340 = vld [vmem:[#allocation8 + $0x188] sm:$0xff]
      %v341 = vld [vmem:[#allocation8 + $0x190] sm:$0xff]
      %v342 = vld [vmem:[#allocation8 + $0x198] sm:$0xff]
      %v343 = vld [vmem:[#allocation8 + $0x1a0] sm:$0xff]
      %v344 = vld [vmem:[#allocation8 + $0x1a8] sm:$0xff]
      %v345 = vld [vmem:[#allocation8 + $0x1b0] sm:$0xff]
      %v346 = vld [vmem:[#allocation8 + $0x1b8] sm:$0xff]
      %v347 = vld [vmem:[#allocation8 + $0x1c0] sm:$0xff]
      %v348 = vld [vmem:[#allocation8 + $0x1c8] sm:$0xff]
      %v349 = vld [vmem:[#allocation8 + $0x1d0] sm:$0xff]
      %v350 = vld [vmem:[#allocation8 + $0x1d8] sm:$0xff]
      %v351 = vld [vmem:[#allocation8 + $0x1e0] sm:$0xff]
      %v352 = vld [vmem:[#allocation8 + $0x1e8] sm:$0xff]
      %v353 = vld [vmem:[#allocation8 + $0x1f0] sm:$0xff]
      %v354 = vld [vmem:[#allocation8 + $0x1f8] sm:$0xff]
      %v355 = vld [vmem:[%s4] sm:$0x1]
      %v357 = vlaneseq
      %v358 = vshrl.u32 %v357, 7
      %v359 = vsub.s32 0, %v358
      %v360 = vrot.slane %v355, %v359
      %362 = vmatprep.subr.mxu0 0.0
      %363 = vmatpush1.msra.mxu0 %v306
      %364 = vmatprep.subr.mxu0 0.0
      %365 = vmatpush1.msra.mxu0 %v305
      %366 = vmatprep.subr.mxu0 0.0
      %367 = vmatpush1.msra.mxu0 %v304
      %368 = vmatprep.subr.mxu0 0.0
      %369 = vmatpush1.msra.mxu0 %v303
      %370 = vmatprep.subr.mxu0 0.0
      %371 = vmatpush1.msra.mxu0 %v302
      %372 = vmatprep.subr.mxu0 0.0
      %373 = vmatpush1.msra.mxu0 %v301
      %374 = vmatprep.subr.mxu0 0.0
      %375 = vmatpush1.msra.mxu0 %v300
      %376 = vmatprep.subr.mxu0 0.0
      %377 = vmatpush1.msra.mxu0 %v299
      %378 = vmatprep.subr.mxu0 0.0
      %379 = vmatpush1.msra.mxu0 %v298
      %380 = vmatprep.subr.mxu0 0.0
      %381 = vmatpush1.msra.mxu0 %v297
      %382 = vmatprep.subr.mxu0 0.0
      %383 = vmatpush1.msra.mxu0 %v296
      %384 = vmatprep.subr.mxu0 0.0
      %385 = vmatpush1.msra.mxu0 %v295
      %386 = vmatprep.subr.mxu0 0.0
      %387 = vmatpush1.msra.mxu0 %v294
      %388 = vmatprep.subr.mxu0 0.0
      %389 = vmatpush1.msra.mxu0 %v293
      %390 = vmatprep.subr.mxu0 0.0
      %391 = vmatpush1.msra.mxu0 %v292
      %392 = vmatprep.subr.mxu0 0.0
      %393 = vmatpush1.msra.mxu0 %v291
      %394 = vmatprep.subr.mxu0 0.0
      %395 = vmatpush2.msra.mxu0 %v322
      %396 = vmatprep.subr.mxu0 0.0
      %397 = vmatpush2.msra.mxu0 %v321
      %398 = vmatprep.subr.mxu0 0.0
      %399 = vmatpush2.msra.mxu0 %v320
      %400 = vmatprep.subr.mxu0 0.0
      %401 = vmatpush2.msra.mxu0 %v319
      %402 = vmatprep.subr.mxu0 0.0
      %403 = vmatpush2.msra.mxu0 %v318
      %404 = vmatprep.subr.mxu0 0.0
      %405 = vmatpush2.msra.mxu0 %v317
      %406 = vmatprep.subr.mxu0 0.0
      %407 = vmatpush2.msra.mxu0 %v316
      %408 = vmatprep.subr.mxu0 0.0
      %409 = vmatpush2.msra.mxu0 %v315
      %410 = vmatprep.subr.mxu0 0.0
      %411 = vmatpush2.msra.mxu0 %v314
      %412 = vmatprep.subr.mxu0 0.0
      %413 = vmatpush2.msra.mxu0 %v313
      %414 = vmatprep.subr.mxu0 0.0
      %415 = vmatpush2.msra.mxu0 %v312
      %416 = vmatprep.subr.mxu0 0.0
      %417 = vmatpush2.msra.mxu0 %v311
      %418 = vmatprep.subr.mxu0 0.0
      %419 = vmatpush2.msra.mxu0 %v310
      %420 = vmatprep.subr.mxu0 0.0
      %421 = vmatpush2.msra.mxu0 %v309
      %422 = vmatprep.subr.mxu0 0.0
      %423 = vmatpush2.msra.mxu0 %v308
      %424 = vmatprep.subr.mxu0 0.0
      %425 = vmatpush2.msra.mxu0 %v307
      %426 = vmatprep.mubr.f32.mxu0 %v288
      %427 = vmatmul.mubr.f32.gmra.mxu0 %v287
      %v428 = vpop.f32.mrf.mxu0
      %v429 = vadd.f32 %v360, %v428
      %v430 = vpop.f32.mrf.mxu0
      %431 = vdwg.mxu0
      %432 = vmatprep.subr.mxu0 0.0
      %433 = vmatpush1.msra.mxu0 %v338
      %434 = vmatprep.subr.mxu0 0.0
      %435 = vmatpush1.msra.mxu0 %v337
      %436 = vmatprep.subr.mxu0 0.0
      %437 = vmatpush1.msra.mxu0 %v336
      %438 = vmatprep.subr.mxu0 0.0
      %439 = vmatpush1.msra.mxu0 %v335
      %440 = vmatprep.subr.mxu0 0.0
      %441 = vmatpush1.msra.mxu0 %v334
      %442 = vmatprep.subr.mxu0 0.0
      %443 = vmatpush1.msra.mxu0 %v333
      %444 = vmatprep.subr.mxu0 0.0
      %445 = vmatpush1.msra.mxu0 %v332
      %446 = vmatprep.subr.mxu0 0.0
      %447 = vmatpush1.msra.mxu0 %v331
      %448 = vmatprep.subr.mxu0 0.0
      %449 = vmatpush1.msra.mxu0 %v330
      %450 = vmatprep.subr.mxu0 0.0
      %451 = vmatpush1.msra.mxu0 %v329
      %452 = vmatprep.subr.mxu0 0.0
      %453 = vmatpush1.msra.mxu0 %v328
      %454 = vmatprep.subr.mxu0 0.0
      %455 = vmatpush1.msra.mxu0 %v327
      %456 = vmatprep.subr.mxu0 0.0
      %457 = vmatpush1.msra.mxu0 %v326
      %458 = vmatprep.subr.mxu0 0.0
      %459 = vmatpush1.msra.mxu0 %v325
      %460 = vmatprep.subr.mxu0 0.0
      %461 = vmatpush1.msra.mxu0 %v324
      %462 = vmatprep.subr.mxu0 0.0
      %463 = vmatpush1.msra.mxu0 %v323
      %464 = vmatprep.subr.mxu0 0.0
      %465 = vmatpush2.msra.mxu0 %v354
      %466 = vmatprep.subr.mxu0 0.0
      %467 = vmatpush2.msra.mxu0 %v353
      %468 = vmatprep.subr.mxu0 0.0
      %469 = vmatpush2.msra.mxu0 %v352
      %470 = vmatprep.subr.mxu0 0.0
      %471 = vmatpush2.msra.mxu0 %v351
      %472 = vmatprep.subr.mxu0 0.0
      %473 = vmatpush2.msra.mxu0 %v350
      %474 = vmatprep.subr.mxu0 0.0
      %475 = vmatpush2.msra.mxu0 %v349
      %476 = vmatprep.subr.mxu0 0.0
      %477 = vmatpush2.msra.mxu0 %v348
      %478 = vmatprep.subr.mxu0 0.0
      %479 = vmatpush2.msra.mxu0 %v347
      %480 = vmatprep.subr.mxu0 0.0
      %481 = vmatpush2.msra.mxu0 %v346
      %482 = vmatprep.subr.mxu0 0.0
      %483 = vmatpush2.msra.mxu0 %v345
      %484 = vmatprep.subr.mxu0 0.0
      %485 = vmatpush2.msra.mxu0 %v344
      %486 = vmatprep.subr.mxu0 0.0
      %487 = vmatpush2.msra.mxu0 %v343
      %488 = vmatprep.subr.mxu0 0.0
      %489 = vmatpush2.msra.mxu0 %v342
      %490 = vmatprep.subr.mxu0 0.0
      %491 = vmatpush2.msra.mxu0 %v341
      %492 = vmatprep.subr.mxu0 0.0
      %493 = vmatpush2.msra.mxu0 %v340
      %494 = vmatprep.subr.mxu0 0.0
      %495 = vmatpush2.msra.mxu0 %v339
      %496 = vmatprep.mubr.f32.mxu0 %v290
      %497 = vmatmul.mubr.f32.gmra.mxu0 %v289
      %v498 = vpop.f32.mrf.mxu0
      %v499 = vadd.f32 %v429, %v498
      %v500 = vpop.f32.mrf.mxu0
      %501 = vdwg.mxu0
      %v502 = vmax.f32 %v499, 0.0
      %v503 = vld [vmem:[%s5] sm:$0x1]
      %v505 = vlaneseq
      %v506 = vshrl.u32 %v505, 7
      %v507 = vsub.s32 0, %v506
      %v508 = vrot.slane %v503, %v507
      %v510 = vmul.f32 %v502, %v508
      %511 = vadd.xlane.f32.xlu0 %v510
      %v512 = vpop.xlane.xlu0 %511
      %v513 = vld [vmem:[#allocation3] sm:$0x1]
      %v515 = vlaneseq
      %v516 = vshrl.u32 %v515, 7
      %v517 = vsub.s32 0, %v516
      %v518 = vrot.slane %v513, %v517
      %v520 = vadd.f32 %v512, %v518
      %v521 = vsub.f32 0.0, %v520
      %v522 = vmul.f32 %v521, 1.442695
      %v523 = vpow.pop %v522
      %v524 = vadd.f32 %v523, 1.0
      %v525 = vrcp.pop %v524
      %v526 = vmul.f32 1.0, %v525
      %vm527 = vcmask 7168
      %528 = vst.msk [vmem:[%s7] sm:$0xff] %vm527, %v526
    $region53: #{tpu_custom_call.1} parent=1 // pred_fallthru
      _
    // Predicated region
    $region54: #{tpu_custom_call.1} parent=1 // pred_check
      _
    $region55: #{tpu_custom_call.1} parent=1 // pred_check_branch
      %530 = sbr.rel (0) target = $region57
    $region56: #{tpu_custom_call.1} parent=1 // pred_region
      _
    $region57: #{tpu_custom_call.1} parent=1 // pred_fallthru
      _
    // Predicated region
    $region58: #{tpu_custom_call.1} parent=1 // pred_check
      _
    $region59: #{tpu_custom_call.1} parent=1 // pred_check_branch
      %532 = sbr.rel (0) target = $region61
    $region60: #{tpu_custom_call.1} parent=1 // pred_region
      _
    $region61: #{tpu_custom_call.1} parent=1 // pred_fallthru
      _
    %533 = vsyncpa [#allocation5], 1
    %534 = vsyncpa [#allocation7], 1

</llo_original>
